<compile_context>
chip_gen: v6e
topology: v6e:2x2x1
jax: 0.10.0
libtpu: 0.0.40
codegen_flags: <defaults>
</compile_context>

<pallas_src>
import jax
import jax.numpy as jnp
from jax import lax
from jax.experimental import pallas as pl
from jax.experimental.pallas import tpu as pltpu

_TARGET_BLOCK_BYTES = 2 << 20   # ~2 MiB input block; in+out double-buffered ~8 MiB VMEM
_LANE_WIDTHS = (1024, 896, 768, 640, 512, 384, 256, 128)
_TWO_PI = 6.283185307179586
_GOLDEN = 0x9E3779B9


def _mix32(x):
    """lowbias32: one full-avalanche mixing pass on uint32."""
    x = x ^ (x >> 16)
    x = x * jnp.uint32(0x7FEB352D)
    x = x ^ (x >> 15)
    x = x * jnp.uint32(0x846CA68B)
    x = x ^ (x >> 16)
    return x


def _bits_to_unit(bits):
    """uint32 random bits -> f32 uniform in [0, 1) using the top 24 bits."""
    top = (bits >> 8).astype(jnp.int32)                 # values in [0, 2^24)
    return top.astype(jnp.float32) * jnp.float32(1.0 / (1 << 24))


def _gaussian_noise_kernel(seed_ref, params_ref, x_ref, o_ref):
    mean = params_ref[0]
    std = params_ref[1]
    seed = seed_ref[0].astype(jnp.uint32)
    pid = pl.program_id(0).astype(jnp.uint32)

    tm, tn = x_ref.shape

    # Per-block keys (scalar work only).  Salting with program_id keeps the
    # per-element counter local to one block, so it never approaches 2^32 even
    # for huge tensors (fixes the int32-overflow concern of the old version).
    base = seed ^ (pid * jnp.uint32(_GOLDEN))
    k1 = _mix32(base ^ jnp.uint32(0x243F6A88))
    k2 = _mix32(base ^ jnp.uint32(0x85A308D3))

    x_f = x_ref[...].astype(jnp.float32)

    if tm % 2 == 0:
        # Main path: one uniform pair per TWO outputs, using BOTH Box-Muller
        # outputs.  Halves hash + log + sqrt work per element vs. cos-only.
        hm = tm // 2
        row = lax.broadcasted_iota(jnp.uint32, (hm, tn), 0)
        col = lax.broadcasted_iota(jnp.uint32, (hm, tn), 1)
        idx = row * jnp.uint32(tn) + col
        b1 = _mix32(idx + k1)                      # single mixing round / stream
        b2 = _mix32(idx + k2)
        u1 = jnp.float32(1.0) - _bits_to_unit(b1)  # (0, 1], log-safe
        u2 = _bits_to_unit(b2)                     # [0, 1)
        r = jnp.sqrt(jnp.float32(-2.0) * jnp.log(u1))
        theta = jnp.float32(_TWO_PI) * u2
        # If VALU is still the binder on v6e (cos/sin lower to VPU polynomials),
        # a transcendental-free normal approximation could replace this.
        o_ref[0:hm, :] = (x_f[0:hm, :] + (r * jnp.cos(theta)) * std + mean
                          ).astype(o_ref.dtype)
        o_ref[hm:tm, :] = (x_f[hm:tm, :] + (r * jnp.sin(theta)) * std + mean
                           ).astype(o_ref.dtype)
    else:
        # Rare fallback (tiny tensors with an odd row count): one normal per
        # element, cos-only Box-Muller.
        row = lax.broadcasted_iota(jnp.uint32, (tm, tn), 0)
        col = lax.broadcasted_iota(jnp.uint32, (tm, tn), 1)
        idx = row * jnp.uint32(tn) + col
        b1 = _mix32(idx + k1)
        b2 = _mix32(idx + k2)
        u1 = jnp.float32(1.0) - _bits_to_unit(b1)
        u2 = _bits_to_unit(b2)
        z = (jnp.sqrt(jnp.float32(-2.0) * jnp.log(u1))
             * jnp.cos(jnp.float32(_TWO_PI) * u2))
        o_ref[...] = (x_f + z * std + mean).astype(o_ref.dtype)


def _sublane_tile(dtype):
    itemsize = jnp.dtype(dtype).itemsize
    return {4: 8, 2: 16, 1: 32}.get(itemsize, 8)


def gaussian_noise(x, seed, *, mean=0.0, std=0.0, training=True):
    """Forward of GaussianNoise: x + randn_like(x) * std + mean (training mode)."""
    if not training:
        return x
    # Fast paths (including the module defaults mean=0.0, std=0): exact result,
    # skip the HBM pass entirely.
    if std == 0.0 and mean == 0.0:
        return x
    if std == 0.0:
        return x + jnp.asarray(mean, dtype=x.dtype)

    orig_shape = x.shape
    orig_dtype = x.dtype
    n = x.size
    if n == 0:
        return x

    # Lane-dense 2-D view.  Any multiple-of-128 width dividing n avoids the
    # pad + slice passes entirely; only truly ragged sizes (n % 128 != 0) pad,
    # and then only to the next multiple of 128.
    tn = next((w for w in _LANE_WIDTHS if n % w == 0), None)
    if tn is None:
        pad = (-n) % 128
        n_pad = n + pad
        tn = next(w for w in _LANE_WIDTHS if n_pad % w == 0)
        flat = jnp.pad(x.reshape(-1), (0, pad))        # rare ragged fallback
    else:
        pad = 0
        flat = x.reshape(-1)
    rows = flat.shape[0] // tn
    x2d = flat.reshape(rows, tn)

    itemsize = jnp.dtype(orig_dtype).itemsize
    # Keep tm a multiple of 2x the dtype's sublane tile so both Box-Muller
    # half-blocks stay sublane-aligned (no masked partial stores).
    row_align = 2 * _sublane_tile(orig_dtype)
    target_rows = max(row_align, _TARGET_BLOCK_BYTES // (tn * itemsize))
    if rows <= target_rows:
        tm = rows                                      # single full-extent block
        grid = (1,)
    else:
        tm = max(row_align, (target_rows // row_align) * row_align)
        grid = (pl.cdiv(rows, tm),)                    # partial last block is masked

    seed_arr = jnp.asarray([seed], dtype=jnp.int32)
    params_arr = jnp.asarray([mean, std], dtype=jnp.float32)

    out2d = pl.pallas_call(
        _gaussian_noise_kernel,
        out_shape=jax.ShapeDtypeStruct((rows, tn), orig_dtype),
        grid=grid,
        in_specs=[
            pl.BlockSpec(memory_space=pltpu.MemorySpace.SMEM),   # seed
            pl.BlockSpec(memory_space=pltpu.MemorySpace.SMEM),   # [mean, std]
            pl.BlockSpec((tm, tn), lambda i: (i, 0)),
        ],
        out_specs=pl.BlockSpec((tm, tn), lambda i: (i, 0)),
        # Output reuses x's HBM buffer when x is dead after the call (XLA
        # inserts a copy otherwise) -> halves peak HBM footprint.
        input_output_aliases={2: 0},
        compiler_params=pltpu.CompilerParams(
            # Per-block independent RNG -> grid shards across TensorCores.
            dimension_semantics=("parallel",),
            vmem_limit_bytes=32 << 20,
        ),
    )(seed_arr, params_arr, x2d)

    if pad:
        return out2d.reshape(-1)[:n].reshape(orig_shape)
    return out2d.reshape(orig_shape)


if __name__ == "__main__":
    key = jax.random.PRNGKey(0)
    # NCHW activations, like the conv features this module would see.
    x = jax.random.normal(key, (2, 4, 16, 16), dtype=jnp.float32)

    # 1) Module defaults (mean=0.0, std=0.0): output must equal input exactly.
    y0 = gaussian_noise(x, seed=0, mean=0.0, std=0.0, training=True)
    jax.block_until_ready(y0)
    assert y0.shape == x.shape and y0.dtype == x.dtype
    assert bool(jnp.all(y0 == x))

    # 2) Non-trivial noise through the Pallas kernel: check statistics of y - x.
    mean, std = 0.5, 0.1
    y1 = gaussian_noise(x, seed=1234, mean=mean, std=std, training=True)
    jax.block_until_ready(y1)
    assert y1.shape == x.shape and y1.dtype == x.dtype
    noise = y1 - x
    emp_mean = float(jnp.mean(noise))
    emp_std = float(jnp.std(noise))
    assert abs(emp_mean - mean) < 0.05, emp_mean
    assert abs(emp_std - std) < 0.05, emp_std

    # 3) Eval mode: identity.
    y2 = gaussian_noise(x, seed=7, mean=mean, std=std, training=False)
    jax.block_until_ready(y2)
    assert bool(jnp.all(y2 == x))

    # 4) Multi-block grid with a partial last block: tail rows must be written.
    xb = jax.random.normal(jax.random.PRNGKey(1), (520, 1024), dtype=jnp.float32)
    yb = gaussian_noise(xb, seed=42, mean=0.0, std=1.0, training=True)
    jax.block_until_ready(yb)
    nb = yb - xb
    assert bool(jnp.all(jnp.isfinite(yb)))
    assert abs(float(jnp.mean(nb))) < 0.02
    assert abs(float(jnp.std(nb)) - 1.0) < 0.02
    tail = nb[-8:]                      # rows belonging to the partial final block
    assert abs(float(jnp.std(tail)) - 1.0) < 0.1

    # 5) Ragged size (not a multiple of 128): padded fallback path.
    xr = jax.random.normal(jax.random.PRNGKey(2), (3, 5, 7), dtype=jnp.float32)
    yr = gaussian_noise(xr, seed=3, mean=0.2, std=0.3, training=True)
    jax.block_until_ready(yr)
    assert yr.shape == xr.shape and yr.dtype == xr.dtype
    assert bool(jnp.all(jnp.isfinite(yr)))

    # 6) bf16 activations: exercises the dtype-aware sublane alignment of tm.
    xh = jax.random.normal(jax.random.PRNGKey(3), (4, 8, 32, 32),
                           dtype=jnp.bfloat16)
    yh = gaussian_noise(xh, seed=9, mean=0.0, std=1.0, training=True)
    jax.block_until_ready(yh)
    assert yh.shape == xh.shape and yh.dtype == xh.dtype
    nh = (yh.astype(jnp.float32) - xh.astype(jnp.float32))
    assert bool(jnp.all(jnp.isfinite(nh)))
    assert abs(float(jnp.mean(nh))) < 0.05
    assert abs(float(jnp.std(nh)) - 1.0) < 0.05

    print("KERNEL_OK")
</pallas_src>

<mosaic_0001>
module attributes {stable_mosaic.version = 11 : i64} {
  func.func @_gaussian_noise_kernel(%arg0: i32, %arg1: memref<1xi32, #tpu.memory_space<smem>>, %arg2: memref<2xf32, #tpu.memory_space<smem>>, %arg3: memref<2x1024xf32, #tpu.memory_space<vmem>>, %arg4: memref<2x1024xf32, #tpu.memory_space<vmem>>) attributes {dimension_semantics = [#tpu.dimension_semantics<parallel>], iteration_bounds = array<i64: 1>, scalar_prefetch = 0 : i64, scratch_operands = 0 : i64, tpu.core_type = #tpu.core_type<tc>, window_params = [{transform_indices = @transform_0, window_bounds = array<i64: 1>}, {transform_indices = @transform_1, window_bounds = array<i64: 2>}, {transform_indices = @transform_2, window_bounds = array<i64: 2, 1024>}, {transform_indices = @transform_3, window_bounds = array<i64: 2, 1024>}]} {
    %c0 = arith.constant 0 : index
    %0 = memref.load %arg2[%c0] : memref<2xf32, #tpu.memory_space<smem>>
    %c1 = arith.constant 1 : index
    %1 = memref.load %arg2[%c1] : memref<2xf32, #tpu.memory_space<smem>>
    %c0_0 = arith.constant 0 : index
    %2 = memref.load %arg1[%c0_0] : memref<1xi32, #tpu.memory_space<smem>>
    %c-1640531527_i32 = arith.constant -1640531527 : i32
    %3 = arith.muli %arg0, %c-1640531527_i32 : i32
    %4 = arith.xori %2, %3 : i32
    %c608135816_i32 = arith.constant 608135816 : i32
    %5 = arith.xori %4, %c608135816_i32 : i32
    %c16_i32 = arith.constant 16 : i32
    %6 = arith.shrui %5, %c16_i32 : i32
    %7 = arith.xori %5, %6 : i32
    %c2146121005_i32 = arith.constant 2146121005 : i32
    %8 = arith.muli %7, %c2146121005_i32 : i32
    %c15_i32 = arith.constant 15 : i32
    %9 = arith.shrui %8, %c15_i32 : i32
    %10 = arith.xori %8, %9 : i32
    %c-2073254261_i32 = arith.constant -2073254261 : i32
    %11 = arith.muli %10, %c-2073254261_i32 : i32
    %c16_i32_1 = arith.constant 16 : i32
    %12 = arith.shrui %11, %c16_i32_1 : i32
    %13 = arith.xori %11, %12 : i32
    %c-2052912941_i32 = arith.constant -2052912941 : i32
    %14 = arith.xori %4, %c-2052912941_i32 : i32
    %c16_i32_2 = arith.constant 16 : i32
    %15 = arith.shrui %14, %c16_i32_2 : i32
    %16 = arith.xori %14, %15 : i32
    %c2146121005_i32_3 = arith.constant 2146121005 : i32
    %17 = arith.muli %16, %c2146121005_i32_3 : i32
    %c15_i32_4 = arith.constant 15 : i32
    %18 = arith.shrui %17, %c15_i32_4 : i32
    %19 = arith.xori %17, %18 : i32
    %c-2073254261_i32_5 = arith.constant -2073254261 : i32
    %20 = arith.muli %19, %c-2073254261_i32_5 : i32
    %c16_i32_6 = arith.constant 16 : i32
    %21 = arith.shrui %20, %c16_i32_6 : i32
    %22 = arith.xori %20, %21 : i32
    %c0_7 = arith.constant 0 : index
    %c0_8 = arith.constant 0 : index
    %23 = vector.load %arg3[%c0_7, %c0_8] : memref<2x1024xf32, #tpu.memory_space<vmem>>, vector<2x1024xf32>
    %24 = tpu.iota {dimensions = array<i32: 0>} : vector<1x1024xi32>
    %25 = tpu.iota {dimensions = array<i32: 1>} : vector<1x1024xi32>
    %c1024_i32 = arith.constant 1024 : i32
    %26 = vector.broadcast %c1024_i32 : i32 to vector<1x1024xi32>
    %27 = arith.muli %24, %26 : vector<1x1024xi32>
    %28 = arith.addi %27, %25 : vector<1x1024xi32>
    %29 = vector.broadcast %13 : i32 to vector<1x1024xi32>
    %30 = arith.addi %28, %29 : vector<1x1024xi32>
    %c16_i32_9 = arith.constant 16 : i32
    %31 = vector.broadcast %c16_i32_9 : i32 to vector<1x1024xi32>
    %32 = arith.shrui %30, %31 : vector<1x1024xi32>
    %33 = arith.xori %30, %32 : vector<1x1024xi32>
    %c2146121005_i32_10 = arith.constant 2146121005 : i32
    %34 = vector.broadcast %c2146121005_i32_10 : i32 to vector<1x1024xi32>
    %35 = arith.muli %33, %34 : vector<1x1024xi32>
    %c15_i32_11 = arith.constant 15 : i32
    %36 = vector.broadcast %c15_i32_11 : i32 to vector<1x1024xi32>
    %37 = arith.shrui %35, %36 : vector<1x1024xi32>
    %38 = arith.xori %35, %37 : vector<1x1024xi32>
    %c-2073254261_i32_12 = arith.constant -2073254261 : i32
    %39 = vector.broadcast %c-2073254261_i32_12 : i32 to vector<1x1024xi32>
    %40 = arith.muli %38, %39 : vector<1x1024xi32>
    %c16_i32_13 = arith.constant 16 : i32
    %41 = vector.broadcast %c16_i32_13 : i32 to vector<1x1024xi32>
    %42 = arith.shrui %40, %41 : vector<1x1024xi32>
    %43 = arith.xori %40, %42 : vector<1x1024xi32>
    %44 = vector.broadcast %22 : i32 to vector<1x1024xi32>
    %45 = arith.addi %28, %44 : vector<1x1024xi32>
    %c16_i32_14 = arith.constant 16 : i32
    %46 = vector.broadcast %c16_i32_14 : i32 to vector<1x1024xi32>
    %47 = arith.shrui %45, %46 : vector<1x1024xi32>
    %48 = arith.xori %45, %47 : vector<1x1024xi32>
    %c2146121005_i32_15 = arith.constant 2146121005 : i32
    %49 = vector.broadcast %c2146121005_i32_15 : i32 to vector<1x1024xi32>
    %50 = arith.muli %48, %49 : vector<1x1024xi32>
    %c15_i32_16 = arith.constant 15 : i32
    %51 = vector.broadcast %c15_i32_16 : i32 to vector<1x1024xi32>
    %52 = arith.shrui %50, %51 : vector<1x1024xi32>
    %53 = arith.xori %50, %52 : vector<1x1024xi32>
    %c-2073254261_i32_17 = arith.constant -2073254261 : i32
    %54 = vector.broadcast %c-2073254261_i32_17 : i32 to vector<1x1024xi32>
    %55 = arith.muli %53, %54 : vector<1x1024xi32>
    %c16_i32_18 = arith.constant 16 : i32
    %56 = vector.broadcast %c16_i32_18 : i32 to vector<1x1024xi32>
    %57 = arith.shrui %55, %56 : vector<1x1024xi32>
    %58 = arith.xori %55, %57 : vector<1x1024xi32>
    %c8_i32 = arith.constant 8 : i32
    %59 = vector.broadcast %c8_i32 : i32 to vector<1x1024xi32>
    %60 = arith.shrui %43, %59 : vector<1x1024xi32>
    %61 = arith.sitofp %60 : vector<1x1024xi32> to vector<1x1024xf32>
    %cst = arith.constant 5.96046448E-8 : f32
    %62 = vector.broadcast %cst : f32 to vector<1x1024xf32>
    %63 = arith.mulf %61, %62 : vector<1x1024xf32>
    %cst_19 = arith.constant 1.000000e+00 : f32
    %64 = vector.broadcast %cst_19 : f32 to vector<1x1024xf32>
    %65 = arith.subf %64, %63 : vector<1x1024xf32>
    %c8_i32_20 = arith.constant 8 : i32
    %66 = vector.broadcast %c8_i32_20 : i32 to vector<1x1024xi32>
    %67 = arith.shrui %58, %66 : vector<1x1024xi32>
    %68 = arith.sitofp %67 : vector<1x1024xi32> to vector<1x1024xf32>
    %cst_21 = arith.constant 5.96046448E-8 : f32
    %69 = vector.broadcast %cst_21 : f32 to vector<1x1024xf32>
    %70 = arith.mulf %68, %69 : vector<1x1024xf32>
    %71 = math.log %65 : vector<1x1024xf32>
    %cst_22 = arith.constant -2.000000e+00 : f32
    %72 = vector.broadcast %cst_22 : f32 to vector<1x1024xf32>
    %73 = arith.mulf %72, %71 : vector<1x1024xf32>
    %74 = math.sqrt %73 : vector<1x1024xf32>
    %cst_23 = arith.constant 6.28318548 : f32
    %75 = vector.broadcast %cst_23 : f32 to vector<1x1024xf32>
    %76 = arith.mulf %75, %70 : vector<1x1024xf32>
    %77 = vector.extract_strided_slice %23 {offsets = [0, 0], sizes = [1, 1024], strides = [1, 1]} : vector<2x1024xf32> to vector<1x1024xf32>
    %78 = math.cos %76 : vector<1x1024xf32>
    %79 = arith.mulf %74, %78 : vector<1x1024xf32>
    %80 = vector.broadcast %1 : f32 to vector<1x1024xf32>
    %81 = arith.mulf %79, %80 : vector<1x1024xf32>
    %82 = arith.addf %77, %81 : vector<1x1024xf32>
    %83 = vector.broadcast %0 : f32 to vector<1x1024xf32>
    %84 = arith.addf %82, %83 : vector<1x1024xf32>
    %c0_24 = arith.constant 0 : index
    %c0_25 = arith.constant 0 : index
    %85 = vector.load %arg4[%c0_24, %c0_25] : memref<2x1024xf32, #tpu.memory_space<vmem>>, vector<1x1024xf32>
    tpu.vector_store %arg4[%c0_24, %c0_25], %84 {strides = array<i32>} : memref<2x1024xf32, #tpu.memory_space<vmem>>, vector<1x1024xf32>,
    %86 = vector.extract_strided_slice %23 {offsets = [1, 0], sizes = [1, 1024], strides = [1, 1]} : vector<2x1024xf32> to vector<1x1024xf32>
    %87 = math.sin %76 : vector<1x1024xf32>
    %88 = arith.mulf %74, %87 : vector<1x1024xf32>
    %89 = vector.broadcast %1 : f32 to vector<1x1024xf32>
    %90 = arith.mulf %88, %89 : vector<1x1024xf32>
    %91 = arith.addf %86, %90 : vector<1x1024xf32>
    %92 = vector.broadcast %0 : f32 to vector<1x1024xf32>
    %93 = arith.addf %91, %92 : vector<1x1024xf32>
    %c1_26 = arith.constant 1 : index
    %c0_27 = arith.constant 0 : index
    %94 = vector.load %arg4[%c1_26, %c0_27] : memref<2x1024xf32, #tpu.memory_space<vmem>>, vector<1x1024xf32>
    tpu.vector_store %arg4[%c1_26, %c0_27], %93 {strides = array<i32>} : memref<2x1024xf32, #tpu.memory_space<vmem>>, vector<1x1024xf32>,
    return
  }
  func.func @transform_0(%arg0: i32) -> i32 {
    %c0_i32 = arith.constant 0 : i32
    %c0_i32_0 = arith.constant 0 : i32
    return %c0_i32 : i32
  }
  func.func @transform_1(%arg0: i32) -> i32 {
    %c0_i32 = arith.constant 0 : i32
    %c0_i32_0 = arith.constant 0 : i32
    return %c0_i32 : i32
  }
  func.func @transform_2(%arg0: i32) -> (i32, i32) {
    %c0_i32 = arith.constant 0 : i32
    %c0_i32_0 = arith.constant 0 : i32
    return %arg0, %c0_i32 : i32, i32
  }
  func.func @transform_3(%arg0: i32) -> (i32, i32) {
    %c0_i32 = arith.constant 0 : i32
    %c0_i32_0 = arith.constant 0 : i32
    return %arg0, %c0_i32 : i32, i32
  }
}

</mosaic_0001>

<llo_original>
// kernel: tpu_custom_call.1
$region0: #{tpu_custom_call.1}
  #allocation0 [shape = 'u32[]', space=smem, size = 0x4, offset = 0x4, fixed_abs, tag = 'smem constant byte address 0x4 - core index']
  #allocation1 [shape = 'u32[144,128]{1,0:T(1,128)}', space=vmem, size = 0x12000, scoped, tag = 'internal scratch']
  #allocation2 [shape = 's32[1]{0:T(128)S(6)}', space=smem, size = 0x200, scoped, tag = 'scoped memory for tpu_custom_call.1']
  %s0 = inlined_call_operand.<no memory space> [shape: s32[1], index: 0, kind: input, shape index: {}]
  %s1 = inlined_call_operand.vmem [shape: f32[2], index: 1, kind: input, shape index: {}]
  %s2 = inlined_call_operand.hbm [shape: f32[2,1024], index: 2, kind: input, shape index: {}, may-alias: {2,3}]
  %s3 = inlined_call_operand.hbm [shape: f32[2,1024], index: 3, kind: output, shape index: {}, may-alias: {2,3}]
  %s4 = sld [smem:[#allocation0]]
  $region30: #{tpu_custom_call.1} parent=0
    _
  %s6 = ssub.s32 1, %s4
  %s7 = scalar_select 0, %s6, %s4
  %8 = sst [smem:[#allocation2]] %s0
  $region1: #{tpu_custom_call.1} parent=0
    #allocation3 [shape = 'u8[512]{0}', space=smem, size = 0x200, scoped, tag = 'input window, operand 1, single buffered']
    #allocation4 [shape = 's32[1]{0}', space=sflag, size = 0x4, scoped, tag = 'scoped memory for tpu_custom_call.1']
    #allocation5 [shape = 's32[1]{0}', space=sflag, size = 0x4, scoped, tag = 'scoped memory for tpu_custom_call.1']
    #allocation6 [shape = 's32[1]{0}', space=sflag, size = 0x4, scoped, tag = 'scoped memory for tpu_custom_call.1']
    #allocation7 [shape = 'u8[8192]{0}', space=vmem, size = 0x2000, scoped, tag = 'input window, operand 2, single buffered']
    #allocation8 [shape = 'u8[8192]{0}', space=vmem, size = 0x2000, scoped, tag = 'output window, operand 0, single buffered']
    %9 = vsyncpa [#allocation6], 0
    %10 = vsyncpa [#allocation4], 0
    %11 = vsyncpa [#allocation5], 0
    // Predicated region
    $region2: #{tpu_custom_call.1} parent=1 // pred_check
      _
    $region3: #{tpu_custom_call.1} parent=1 // pred_check_branch
      %13 = sbr.rel (0) target = $region5
    $region4: #{tpu_custom_call.1} parent=1 // pred_region
      _
    $region5: #{tpu_custom_call.1} parent=1 // pred_fallthru
      _
    // Predicated region
    $region6: #{tpu_custom_call.1} parent=1 // pred_check
      _
    $region7: #{tpu_custom_call.1} parent=1 // pred_check_branch
      %15 = sbr.rel (0) target = $region9
    $region8: #{tpu_custom_call.1} parent=1 // pred_region
      %s17 = ssub.s32 16, 16
      %18 = vsyncadd [#allocation6], %s17
      %s20 = sshll.u32 %s1, 4
      %s21 = int_to_ptr.vmem [resolvable:$true] %s20
      %23 = dma.vmem_to_smem %s21, 16, [#allocation3], [#allocation6]
    $region9: #{tpu_custom_call.1} parent=1 // pred_fallthru
      _
    // Predicated region
    $region10: #{tpu_custom_call.1} parent=1 // pred_check
      _
    $region11: #{tpu_custom_call.1} parent=1 // pred_check_branch
      %25 = sbr.rel (0) target = $region13
    $region12: #{tpu_custom_call.1} parent=1 // pred_region
      %s27 = ssub.s32 256, 256
      %28 = vsyncadd [#allocation4], %s27
      %s30 = sshll.u32 [#allocation7], 4
      %s31 = int_to_ptr.vmem [resolvable:$true] %s30
      %33 = dma.hbm_to_vmem [thread:$0]  %s2, 256, %s31, [#allocation4]
    $region13: #{tpu_custom_call.1} parent=1 // pred_fallthru
      _
    // Predicated region
    $region14: #{tpu_custom_call.1} parent=1 // pred_check
      _
    $region15: #{tpu_custom_call.1} parent=1 // pred_check_branch
      %35 = sbr.rel (0) target = $region17
    $region16: #{tpu_custom_call.1} parent=1 // pred_region
      %36 = dma.done [#allocation6], 16
    $region17: #{tpu_custom_call.1} parent=1 // pred_fallthru
      _
    // Predicated region
    $region18: #{tpu_custom_call.1} parent=1 // pred_check
      _
    $region19: #{tpu_custom_call.1} parent=1 // pred_check_branch
      %38 = sbr.rel (0) target = $region21
    $region20: #{tpu_custom_call.1} parent=1 // pred_region
      %39 = dma.done [#allocation4], 256
    $region21: #{tpu_custom_call.1} parent=1 // pred_fallthru
      _
    %40 = sfence
    %s41 = sld [smem:[#allocation3]]
    %s42 = sld [smem:[#allocation3 + $0x1]]
    %s43 = sld [smem:[#allocation2]]
    %s44 = smul.u32 0, 2654435769
    %s45 = sxor.u32 %s43, %s44
    %s46 = sxor.u32 %s45, 608135816
    %s47 = sshrl.u32 %s46, 16
    %s48 = sxor.u32 %s46, %s47
    %s49 = smul.u32 %s48, 2146121005
    %s50 = sshrl.u32 %s49, 15
    %s51 = sxor.u32 %s49, %s50
    %s52 = smul.u32 %s51, 2221713035
    %s53 = sshrl.u32 %s52, 16
    %s54 = sxor.u32 %s52, %s53
    %s55 = sxor.u32 %s45, 2242054355
    %s56 = sshrl.u32 %s55, 16
    %s57 = sxor.u32 %s55, %s56
    %s58 = smul.u32 %s57, 2146121005
    %s59 = sshrl.u32 %s58, 15
    %s60 = sxor.u32 %s58, %s59
    %s61 = smul.u32 %s60, 2221713035
    %s62 = sshrl.u32 %s61, 16
    %s63 = sxor.u32 %s61, %s62
    %v64 = vld [vmem:[#allocation7] sm:$0xff]
    %v65 = vld [vmem:[#allocation7 + $0x8] sm:$0xff]
    %v66 = vlaneseq
    %v67 = vshrl.u32 %v66, 7
    %v68 = vlaneseq
    %v69 = vand.u32 %v68, 127
    %v70 = vadd.s32 %v69, 128
    %v71 = vadd.s32 %v69, 256
    %v72 = vadd.s32 %v69, 384
    %v73 = vadd.s32 %v69, 512
    %v74 = vadd.s32 %v69, 640
    %v75 = vadd.s32 %v69, 768
    %v76 = vadd.s32 %v69, 896
    %v77 = vmul.u32 %v67, 1024
    %v78 = vadd.s32 %v77, %v69
    %v79 = vadd.s32 %v77, %v70
    %v80 = vadd.s32 %v77, %v71
    %v81 = vadd.s32 %v77, %v72
    %v82 = vadd.s32 %v77, %v73
    %v83 = vadd.s32 %v77, %v74
    %v84 = vadd.s32 %v77, %v75
    %v85 = vadd.s32 %v77, %v76
    %v86 = vstv %s54
    %v87 = vadd.s32 %v78, %v86
    %v88 = vadd.s32 %v79, %v86
    %v89 = vadd.s32 %v80, %v86
    %v90 = vadd.s32 %v81, %v86
    %v91 = vadd.s32 %v82, %v86
    %v92 = vadd.s32 %v83, %v86
    %v93 = vadd.s32 %v84, %v86
    %v94 = vadd.s32 %v85, %v86
    %v95 = vshrl.u32 %v87, 16
    %v96 = vshrl.u32 %v88, 16
    %v97 = vshrl.u32 %v89, 16
    %v98 = vshrl.u32 %v90, 16
    %v99 = vshrl.u32 %v91, 16
    %v100 = vshrl.u32 %v92, 16
    %v101 = vshrl.u32 %v93, 16
    %v102 = vshrl.u32 %v94, 16
    %v103 = vxor.u32 %v87, %v95
    %v104 = vxor.u32 %v88, %v96
    %v105 = vxor.u32 %v89, %v97
    %v106 = vxor.u32 %v90, %v98
    %v107 = vxor.u32 %v91, %v99
    %v108 = vxor.u32 %v92, %v100
    %v109 = vxor.u32 %v93, %v101
    %v110 = vxor.u32 %v94, %v102
    %v111 = vmul.u32 %v103, 2146121005
    %v112 = vmul.u32 %v104, 2146121005
    %v113 = vmul.u32 %v105, 2146121005
    %v114 = vmul.u32 %v106, 2146121005
    %v115 = vmul.u32 %v107, 2146121005
    %v116 = vmul.u32 %v108, 2146121005
    %v117 = vmul.u32 %v109, 2146121005
    %v118 = vmul.u32 %v110, 2146121005
    %v119 = vshrl.u32 %v111, 15
    %v120 = vshrl.u32 %v112, 15
    %v121 = vshrl.u32 %v113, 15
    %v122 = vshrl.u32 %v114, 15
    %v123 = vshrl.u32 %v115, 15
    %v124 = vshrl.u32 %v116, 15
    %v125 = vshrl.u32 %v117, 15
    %v126 = vshrl.u32 %v118, 15
    %v127 = vxor.u32 %v111, %v119
    %v128 = vxor.u32 %v112, %v120
    %v129 = vxor.u32 %v113, %v121
    %v130 = vxor.u32 %v114, %v122
    %v131 = vxor.u32 %v115, %v123
    %v132 = vxor.u32 %v116, %v124
    %v133 = vxor.u32 %v117, %v125
    %v134 = vxor.u32 %v118, %v126
    %v135 = vmul.u32 %v127, 2221713035
    %v136 = vmul.u32 %v128, 2221713035
    %v137 = vmul.u32 %v129, 2221713035
    %v138 = vmul.u32 %v130, 2221713035
    %v139 = vmul.u32 %v131, 2221713035
    %v140 = vmul.u32 %v132, 2221713035
    %v141 = vmul.u32 %v133, 2221713035
    %v142 = vmul.u32 %v134, 2221713035
    %v143 = vshrl.u32 %v135, 16
    %v144 = vshrl.u32 %v136, 16
    %v145 = vshrl.u32 %v137, 16
    %v146 = vshrl.u32 %v138, 16
    %v147 = vshrl.u32 %v139, 16
    %v148 = vshrl.u32 %v140, 16
    %v149 = vshrl.u32 %v141, 16
    %v150 = vshrl.u32 %v142, 16
    %v151 = vxor.u32 %v135, %v143
    %v152 = vxor.u32 %v136, %v144
    %v153 = vxor.u32 %v137, %v145
    %v154 = vxor.u32 %v138, %v146
    %v155 = vxor.u32 %v139, %v147
    %v156 = vxor.u32 %v140, %v148
    %v157 = vxor.u32 %v141, %v149
    %v158 = vxor.u32 %v142, %v150
    %v159 = vstv %s63
    %v160 = vadd.s32 %v78, %v159
    %v161 = vadd.s32 %v79, %v159
    %v162 = vadd.s32 %v80, %v159
    %v163 = vadd.s32 %v81, %v159
    %v164 = vadd.s32 %v82, %v159
    %v165 = vadd.s32 %v83, %v159
    %v166 = vadd.s32 %v84, %v159
    %v167 = vadd.s32 %v85, %v159
    %v168 = vshrl.u32 %v160, 16
    %v169 = vshrl.u32 %v161, 16
    %v170 = vshrl.u32 %v162, 16
    %v171 = vshrl.u32 %v163, 16
    %v172 = vshrl.u32 %v164, 16
    %v173 = vshrl.u32 %v165, 16
    %v174 = vshrl.u32 %v166, 16
    %v175 = vshrl.u32 %v167, 16
    %v176 = vxor.u32 %v160, %v168
    %v177 = vxor.u32 %v161, %v169
    %v178 = vxor.u32 %v162, %v170
    %v179 = vxor.u32 %v163, %v171
    %v180 = vxor.u32 %v164, %v172
    %v181 = vxor.u32 %v165, %v173
    %v182 = vxor.u32 %v166, %v174
    %v183 = vxor.u32 %v167, %v175
    %v184 = vmul.u32 %v176, 2146121005
    %v185 = vmul.u32 %v177, 2146121005
    %v186 = vmul.u32 %v178, 2146121005
    %v187 = vmul.u32 %v179, 2146121005
    %v188 = vmul.u32 %v180, 2146121005
    %v189 = vmul.u32 %v181, 2146121005
    %v190 = vmul.u32 %v182, 2146121005
    %v191 = vmul.u32 %v183, 2146121005
    %v192 = vshrl.u32 %v184, 15
    %v193 = vshrl.u32 %v185, 15
    %v194 = vshrl.u32 %v186, 15
    %v195 = vshrl.u32 %v187, 15
    %v196 = vshrl.u32 %v188, 15
    %v197 = vshrl.u32 %v189, 15
    %v198 = vshrl.u32 %v190, 15
    %v199 = vshrl.u32 %v191, 15
    %v200 = vxor.u32 %v184, %v192
    %v201 = vxor.u32 %v185, %v193
    %v202 = vxor.u32 %v186, %v194
    %v203 = vxor.u32 %v187, %v195
    %v204 = vxor.u32 %v188, %v196
    %v205 = vxor.u32 %v189, %v197
    %v206 = vxor.u32 %v190, %v198
    %v207 = vxor.u32 %v191, %v199
    %v208 = vmul.u32 %v200, 2221713035
    %v209 = vmul.u32 %v201, 2221713035
    %v210 = vmul.u32 %v202, 2221713035
    %v211 = vmul.u32 %v203, 2221713035
    %v212 = vmul.u32 %v204, 2221713035
    %v213 = vmul.u32 %v205, 2221713035
    %v214 = vmul.u32 %v206, 2221713035
    %v215 = vmul.u32 %v207, 2221713035
    %v216 = vshrl.u32 %v208, 16
    %v217 = vshrl.u32 %v209, 16
    %v218 = vshrl.u32 %v210, 16
    %v219 = vshrl.u32 %v211, 16
    %v220 = vshrl.u32 %v212, 16
    %v221 = vshrl.u32 %v213, 16
    %v222 = vshrl.u32 %v214, 16
    %v223 = vshrl.u32 %v215, 16
    %v224 = vxor.u32 %v208, %v216
    %v225 = vxor.u32 %v209, %v217
    %v226 = vxor.u32 %v210, %v218
    %v227 = vxor.u32 %v211, %v219
    %v228 = vxor.u32 %v212, %v220
    %v229 = vxor.u32 %v213, %v221
    %v230 = vxor.u32 %v214, %v222
    %v231 = vxor.u32 %v215, %v223
    %v232 = vshrl.u32 %v151, 8
    %v233 = vshrl.u32 %v152, 8
    %v234 = vshrl.u32 %v153, 8
    %v235 = vshrl.u32 %v154, 8
    %v236 = vshrl.u32 %v155, 8
    %v237 = vshrl.u32 %v156, 8
    %v238 = vshrl.u32 %v157, 8
    %v239 = vshrl.u32 %v158, 8
    %v240 = vcvt.s32.f32 %v232
    %v241 = vcvt.s32.f32 %v233
    %v242 = vcvt.s32.f32 %v234
    %v243 = vcvt.s32.f32 %v235
    %v244 = vcvt.s32.f32 %v236
    %v245 = vcvt.s32.f32 %v237
    %v246 = vcvt.s32.f32 %v238
    %v247 = vcvt.s32.f32 %v239
    %v248 = vmul.f32 %v240, 5.9604645e-08
    %v249 = vmul.f32 %v241, 5.9604645e-08
    %v250 = vmul.f32 %v242, 5.9604645e-08
    %v251 = vmul.f32 %v243, 5.9604645e-08
    %v252 = vmul.f32 %v244, 5.9604645e-08
    %v253 = vmul.f32 %v245, 5.9604645e-08
    %v254 = vmul.f32 %v246, 5.9604645e-08
    %v255 = vmul.f32 %v247, 5.9604645e-08
    %v256 = vsub.f32 1.0, %v248
    %v257 = vsub.f32 1.0, %v249
    %v258 = vsub.f32 1.0, %v250
    %v259 = vsub.f32 1.0, %v251
    %v260 = vsub.f32 1.0, %v252
    %v261 = vsub.f32 1.0, %v253
    %v262 = vsub.f32 1.0, %v254
    %v263 = vsub.f32 1.0, %v255
    %v264 = vshrl.u32 %v224, 8
    %v265 = vshrl.u32 %v225, 8
    %v266 = vshrl.u32 %v226, 8
    %v267 = vshrl.u32 %v227, 8
    %v268 = vshrl.u32 %v228, 8
    %v269 = vshrl.u32 %v229, 8
    %v270 = vshrl.u32 %v230, 8
    %v271 = vshrl.u32 %v231, 8
    %v272 = vcvt.s32.f32 %v264
    %v273 = vcvt.s32.f32 %v265
    %v274 = vcvt.s32.f32 %v266
    %v275 = vcvt.s32.f32 %v267
    %v276 = vcvt.s32.f32 %v268
    %v277 = vcvt.s32.f32 %v269
    %v278 = vcvt.s32.f32 %v270
    %v279 = vcvt.s32.f32 %v271
    %v280 = vmul.f32 %v272, 5.9604645e-08
    %v281 = vmul.f32 %v273, 5.9604645e-08
    %v282 = vmul.f32 %v274, 5.9604645e-08
    %v283 = vmul.f32 %v275, 5.9604645e-08
    %v284 = vmul.f32 %v276, 5.9604645e-08
    %v285 = vmul.f32 %v277, 5.9604645e-08
    %v286 = vmul.f32 %v278, 5.9604645e-08
    %v287 = vmul.f32 %v279, 5.9604645e-08
    %v288 = vlog2.pop %v256
    %v289 = vmul.f32 %v288, 0.6931472
    %v290 = vlog2.pop %v257
    %v291 = vmul.f32 %v290, 0.6931472
    %v292 = vlog2.pop %v258
    %v293 = vmul.f32 %v292, 0.6931472
    %v294 = vlog2.pop %v259
    %v295 = vmul.f32 %v294, 0.6931472
    %v296 = vlog2.pop %v260
    %v297 = vmul.f32 %v296, 0.6931472
    %v298 = vlog2.pop %v261
    %v299 = vmul.f32 %v298, 0.6931472
    %v300 = vlog2.pop %v262
    %v301 = vmul.f32 %v300, 0.6931472
    %v302 = vlog2.pop %v263
    %v303 = vmul.f32 %v302, 0.6931472
    %v304 = vmul.f32 %v289, -2.0
    %v305 = vmul.f32 %v291, -2.0
    %v306 = vmul.f32 %v293, -2.0
    %v307 = vmul.f32 %v295, -2.0
    %v308 = vmul.f32 %v297, -2.0
    %v309 = vmul.f32 %v299, -2.0
    %v310 = vmul.f32 %v301, -2.0
    %v311 = vmul.f32 %v303, -2.0
    %v312 = vrsqrt.pop %v304
    %v313 = vmul.f32 %v304, %v312
    %vm314 = vcmp.eq.f32.partialorder %v304, inf
    %v315 = vsel %vm314, %v304, %v313
    %vm316 = vcmp.eq.f32.partialorder %v304, 0.0
    %v317 = vand.u32 %v304, 2147483648
    %v318 = vsel %vm316, %v317, %v315
    %v319 = vrsqrt.pop %v305
    %v320 = vmul.f32 %v305, %v319
    %vm321 = vcmp.eq.f32.partialorder %v305, inf
    %v322 = vsel %vm321, %v305, %v320
    %vm323 = vcmp.eq.f32.partialorder %v305, 0.0
    %v324 = vand.u32 %v305, 2147483648
    %v325 = vsel %vm323, %v324, %v322
    %v326 = vrsqrt.pop %v306
    %v327 = vmul.f32 %v306, %v326
    %vm328 = vcmp.eq.f32.partialorder %v306, inf
    %v329 = vsel %vm328, %v306, %v327
    %vm330 = vcmp.eq.f32.partialorder %v306, 0.0
    %v331 = vand.u32 %v306, 2147483648
    %v332 = vsel %vm330, %v331, %v329
    %v333 = vrsqrt.pop %v307
    %v334 = vmul.f32 %v307, %v333
    %vm335 = vcmp.eq.f32.partialorder %v307, inf
    %v336 = vsel %vm335, %v307, %v334
    %vm337 = vcmp.eq.f32.partialorder %v307, 0.0
    %v338 = vand.u32 %v307, 2147483648
    %v339 = vsel %vm337, %v338, %v336
    %v340 = vrsqrt.pop %v308
    %v341 = vmul.f32 %v308, %v340
    %vm342 = vcmp.eq.f32.partialorder %v308, inf
    %v343 = vsel %vm342, %v308, %v341
    %vm344 = vcmp.eq.f32.partialorder %v308, 0.0
    %v345 = vand.u32 %v308, 2147483648
    %v346 = vsel %vm344, %v345, %v343
    %v347 = vrsqrt.pop %v309
    %v348 = vmul.f32 %v309, %v347
    %vm349 = vcmp.eq.f32.partialorder %v309, inf
    %v350 = vsel %vm349, %v309, %v348
    %vm351 = vcmp.eq.f32.partialorder %v309, 0.0
    %v352 = vand.u32 %v309, 2147483648
    %v353 = vsel %vm351, %v352, %v350
    %v354 = vrsqrt.pop %v310
    %v355 = vmul.f32 %v310, %v354
    %vm356 = vcmp.eq.f32.partialorder %v310, inf
    %v357 = vsel %vm356, %v310, %v355
    %vm358 = vcmp.eq.f32.partialorder %v310, 0.0
    %v359 = vand.u32 %v310, 2147483648
    %v360 = vsel %vm358, %v359, %v357
    %v361 = vrsqrt.pop %v311
    %v362 = vmul.f32 %v311, %v361
    %vm363 = vcmp.eq.f32.partialorder %v311, inf
    %v364 = vsel %vm363, %v311, %v362
    %vm365 = vcmp.eq.f32.partialorder %v311, 0.0
    %v366 = vand.u32 %v311, 2147483648
    %v367 = vsel %vm365, %v366, %v364
    %v368 = vmul.f32 %v280, 6.2831855
    %v369 = vmul.f32 %v281, 6.2831855
    %v370 = vmul.f32 %v282, 6.2831855
    %v371 = vmul.f32 %v283, 6.2831855
    %v372 = vmul.f32 %v284, 6.2831855
    %v373 = vmul.f32 %v285, 6.2831855
    %v374 = vmul.f32 %v286, 6.2831855
    %v375 = vmul.f32 %v287, 6.2831855
    %v376 = vand.u32 2147483647, %v368
    %vm377 = vcmp.le.f32.partialorder %v376, 0.7853982
    %vm378 = vcmp.lt.s32.totalorder %v368, 0
    %v379 = vand.u32 %v368, 2139095040
    %v380 = vshrl.u32 %v379, 23
    %v381 = vsub.s32 %v380, 127
    %v382 = vand.u32 2147483647, %v368
    %v383 = vand.u32 %v382, 8388607
    %v384 = vor.u32 %v383, 8388608
    %v385 = vsub.s32 0, %v384
    %v386 = vadd.s32 %v381, 1
    %vm387 = vcmp.gt.s32.totalorder %v386, 0
    %v388 = vsel %vm387, %v386, 0
    %v389 = vshrl.u32 %v388, 5
    %v390 = vand.u32 %v388, 31
    %v391 = vsub.s32 32, %v390
    %v392 = vshrl.u32 683565275, %v391
    %v393 = vshll.u32 683565275, %v390
    %v394 = vshrl.u32 2475754826, %v391
    %v395 = vor.u32 %v393, %v394
    %v396 = vshll.u32 2475754826, %v390
    %v397 = vshrl.u32 2131351028, %v391
    %v398 = vor.u32 %v396, %v397
    %v399 = vshll.u32 2131351028, %v390
    %v400 = vshrl.u32 2102212464, %v391
    %v401 = vor.u32 %v399, %v400
    %v402 = vshll.u32 2102212464, %v390
    %v403 = vshrl.u32 920167782, %v391
    %v404 = vor.u32 %v402, %v403
    %v405 = vshll.u32 920167782, %v390
    %v406 = vshrl.u32 1326507024, %v391
    %v407 = vor.u32 %v405, %v406
    %vm408 = vcmp.lt.s32.totalorder %v389, 1
    %vm409 = vcmp.lt.s32.totalorder %v389, 2
    %vm410 = vcmp.lt.s32.totalorder %v389, 3
    %vm411 = vcmp.lt.s32.totalorder %v389, 4
    %v412 = vsel %vm408, %v392, %v395
    %v413 = vsel %vm411, %v401, 2102212464
    %v414 = vsel %vm410, %v398, %v413
    %v415 = vsel %vm409, %v412, %v414
    %v416 = vsel %vm408, %v395, %v398
    %v417 = vsel %vm411, %v404, 920167782
    %v418 = vsel %vm410, %v401, %v417
    %v419 = vsel %vm409, %v416, %v418
    %v420 = vsel %vm408, %v398, %v401
    %v421 = vsel %vm411, %v407, 1326507024
    %v422 = vsel %vm410, %v404, %v421
    %v423 = vsel %vm409, %v420, %v422
    %v424 = vshll.u32 %v384, 8
    %v425 = vmul.u32.u64.compose %v424, %v423
    %v426 = vextract.low.u32 %v425
    %v427 = vextract.high.u32 %v425
    %v428 = vmul.u32.u64.compose %v424, %v419
    %v429 = vextract.low.u32 %v428
    %v430 = vextract.high.u32 %v428
    %v431 = vmul.u32 %v424, %v415
    %v432 = vadd.s32 %v427, %v429
    %vm433 = vc.u32 %v427, %v429
    %v434 = vadd.s32 %v430, 1
    %v435 = vsel %vm433, %v434, %v430
    %v436 = vadd.s32 %v431, %v435
    %v437 = vadd.s32 %v436, 536870912
    %v438 = vshrl.u32 %v437, 30
    %v439 = vshll.u32 %v438, 30
    %v440 = vsub.s32 %v436, %v439
    %vm441 = vcmp.lt.s32.totalorder %v440, 0
    %v442 = vsub.s32 0, %v440
    %v443 = vsel %vm441, %v442, %v440
    %v444 = vclz %v443
    %v445 = vsub.s32 %v444, 2
    %vm446 = vcmp.gt.s32.totalorder 0, %v445
    %v447 = vsel %vm446, 0, %v445
    %v448 = vsub.s32 32, %v447
    %v449 = vshll.u32 %v440, %v447
    %v450 = vshrl.u32 %v432, %v448
    %v451 = vor.u32 %v449, %v450
    %v452 = vsub.s32 4294967266, %v447
    %v453 = vadd.s32 %v452, 127
    %v454 = vshll.u32 %v453, 23
    %v455 = vor.u32 4788187, %v454
    %v456 = vand.u32 2147483647, %v455
    %v458 = vcvt.s32.f32 %v451
    %v459 = vmul.f32 %v458, %v456
    %v460 = vxor.u32 %v459, 2147483648
    %v461 = vsel %vm378, %v460, %v459
    %v462 = vsub.s32 4, %v438
    %v463 = vsel %vm378, %v462, %v438
    %v464 = vsel %vm377, %v368, %v461
    %v465 = vsel %vm377, 0, %v463
    %v466 = vcosq.f32.pop %v464
    %v467 = vsinq.f32.pop %v464
    %vm468 = vweird.f32 %v368
    %v469 = vand.u32 %v465, 3
    %vm470 = vcmp.lt.s32.totalorder %v469, 2
    %vm471 = vcmp.eq.s32.totalorder %v469, 0
    %v472 = vxor.u32 %v467, 2147483648
    %v473 = vsel %vm471, %v466, %v472
    %vm474 = vcmp.eq.s32.totalorder %v469, 2
    %v475 = vxor.u32 %v466, 2147483648
    %v476 = vsel %vm474, %v475, %v467
    %v477 = vsel %vm470, %v473, %v476
    %v478 = vsel %vm468, nan, %v477
    %v479 = vand.u32 2147483647, %v369
    %vm480 = vcmp.le.f32.partialorder %v479, 0.7853982
    %vm481 = vcmp.lt.s32.totalorder %v369, 0
    %v482 = vand.u32 %v369, 2139095040
    %v483 = vshrl.u32 %v482, 23
    %v484 = vsub.s32 %v483, 127
    %v485 = vand.u32 2147483647, %v369
    %v486 = vand.u32 %v485, 8388607
    %v487 = vor.u32 %v486, 8388608
    %v488 = vsub.s32 0, %v487
    %v489 = vadd.s32 %v484, 1
    %vm490 = vcmp.gt.s32.totalorder %v489, 0
    %v491 = vsel %vm490, %v489, 0
    %v492 = vshrl.u32 %v491, 5
    %v493 = vand.u32 %v491, 31
    %v494 = vsub.s32 32, %v493
    %v495 = vshrl.u32 683565275, %v494
    %v496 = vshll.u32 683565275, %v493
    %v497 = vshrl.u32 2475754826, %v494
    %v498 = vor.u32 %v496, %v497
    %v499 = vshll.u32 2475754826, %v493
    %v500 = vshrl.u32 2131351028, %v494
    %v501 = vor.u32 %v499, %v500
    %v502 = vshll.u32 2131351028, %v493
    %v503 = vshrl.u32 2102212464, %v494
    %v504 = vor.u32 %v502, %v503
    %v505 = vshll.u32 2102212464, %v493
    %v506 = vshrl.u32 920167782, %v494
    %v507 = vor.u32 %v505, %v506
    %v508 = vshll.u32 920167782, %v493
    %v509 = vshrl.u32 1326507024, %v494
    %v510 = vor.u32 %v508, %v509
    %vm511 = vcmp.lt.s32.totalorder %v492, 1
    %vm512 = vcmp.lt.s32.totalorder %v492, 2
    %vm513 = vcmp.lt.s32.totalorder %v492, 3
    %vm514 = vcmp.lt.s32.totalorder %v492, 4
    %v515 = vsel %vm511, %v495, %v498
    %v516 = vsel %vm514, %v504, 2102212464
    %v517 = vsel %vm513, %v501, %v516
    %v518 = vsel %vm512, %v515, %v517
    %v519 = vsel %vm511, %v498, %v501
    %v520 = vsel %vm514, %v507, 920167782
    %v521 = vsel %vm513, %v504, %v520
    %v522 = vsel %vm512, %v519, %v521
    %v523 = vsel %vm511, %v501, %v504
    %v524 = vsel %vm514, %v510, 1326507024
    %v525 = vsel %vm513, %v507, %v524
    %v526 = vsel %vm512, %v523, %v525
    %v527 = vshll.u32 %v487, 8
    %v528 = vmul.u32.u64.compose %v527, %v526
    %v529 = vextract.low.u32 %v528
    %v530 = vextract.high.u32 %v528
    %v531 = vmul.u32.u64.compose %v527, %v522
    %v532 = vextract.low.u32 %v531
    %v533 = vextract.high.u32 %v531
    %v534 = vmul.u32 %v527, %v518
    %v535 = vadd.s32 %v530, %v532
    %vm536 = vc.u32 %v530, %v532
    %v537 = vadd.s32 %v533, 1
    %v538 = vsel %vm536, %v537, %v533
    %v539 = vadd.s32 %v534, %v538
    %v540 = vadd.s32 %v539, 536870912
    %v541 = vshrl.u32 %v540, 30
    %v542 = vshll.u32 %v541, 30
    %v543 = vsub.s32 %v539, %v542
    %vm544 = vcmp.lt.s32.totalorder %v543, 0
    %v545 = vsub.s32 0, %v543
    %v546 = vsel %vm544, %v545, %v543
    %v547 = vclz %v546
    %v548 = vsub.s32 %v547, 2
    %vm549 = vcmp.gt.s32.totalorder 0, %v548
    %v550 = vsel %vm549, 0, %v548
    %v551 = vsub.s32 32, %v550
    %v552 = vshll.u32 %v543, %v550
    %v553 = vshrl.u32 %v535, %v551
    %v554 = vor.u32 %v552, %v553
    %v555 = vsub.s32 4294967266, %v550
    %v556 = vadd.s32 %v555, 127
    %v557 = vshll.u32 %v556, 23
    %v558 = vor.u32 4788187, %v557
    %v559 = vand.u32 2147483647, %v558
    %v561 = vcvt.s32.f32 %v554
    %v562 = vmul.f32 %v561, %v559
    %v563 = vxor.u32 %v562, 2147483648
    %v564 = vsel %vm481, %v563, %v562
    %v565 = vsub.s32 4, %v541
    %v566 = vsel %vm481, %v565, %v541
    %v567 = vsel %vm480, %v369, %v564
    %v568 = vsel %vm480, 0, %v566
    %v569 = vcosq.f32.pop %v567
    %v570 = vsinq.f32.pop %v567
    %vm571 = vweird.f32 %v369
    %v572 = vand.u32 %v568, 3
    %vm573 = vcmp.lt.s32.totalorder %v572, 2
    %vm574 = vcmp.eq.s32.totalorder %v572, 0
    %v575 = vxor.u32 %v570, 2147483648
    %v576 = vsel %vm574, %v569, %v575
    %vm577 = vcmp.eq.s32.totalorder %v572, 2
    %v578 = vxor.u32 %v569, 2147483648
    %v579 = vsel %vm577, %v578, %v570
    %v580 = vsel %vm573, %v576, %v579
    %v581 = vsel %vm571, nan, %v580
    %v582 = vand.u32 2147483647, %v370
    %vm583 = vcmp.le.f32.partialorder %v582, 0.7853982
    %vm584 = vcmp.lt.s32.totalorder %v370, 0
    %v585 = vand.u32 %v370, 2139095040
    %v586 = vshrl.u32 %v585, 23
    %v587 = vsub.s32 %v586, 127
    %v588 = vand.u32 2147483647, %v370
    %v589 = vand.u32 %v588, 8388607
    %v590 = vor.u32 %v589, 8388608
    %v591 = vsub.s32 0, %v590
    %v592 = vadd.s32 %v587, 1
    %vm593 = vcmp.gt.s32.totalorder %v592, 0
    %v594 = vsel %vm593, %v592, 0
    %v595 = vshrl.u32 %v594, 5
    %v596 = vand.u32 %v594, 31
    %v597 = vsub.s32 32, %v596
    %v598 = vshrl.u32 683565275, %v597
    %v599 = vshll.u32 683565275, %v596
    %v600 = vshrl.u32 2475754826, %v597
    %v601 = vor.u32 %v599, %v600
    %v602 = vshll.u32 2475754826, %v596
    %v603 = vshrl.u32 2131351028, %v597
    %v604 = vor.u32 %v602, %v603
    %v605 = vshll.u32 2131351028, %v596
    %v606 = vshrl.u32 2102212464, %v597
    %v607 = vor.u32 %v605, %v606
    %v608 = vshll.u32 2102212464, %v596
    %v609 = vshrl.u32 920167782, %v597
    %v610 = vor.u32 %v608, %v609
    %v611 = vshll.u32 920167782, %v596
    %v612 = vshrl.u32 1326507024, %v597
    %v613 = vor.u32 %v611, %v612
    %vm614 = vcmp.lt.s32.totalorder %v595, 1
    %vm615 = vcmp.lt.s32.totalorder %v595, 2
    %vm616 = vcmp.lt.s32.totalorder %v595, 3
    %vm617 = vcmp.lt.s32.totalorder %v595, 4
    %v618 = vsel %vm614, %v598, %v601
    %v619 = vsel %vm617, %v607, 2102212464
    %v620 = vsel %vm616, %v604, %v619
    %v621 = vsel %vm615, %v618, %v620
    %v622 = vsel %vm614, %v601, %v604
    %v623 = vsel %vm617, %v610, 920167782
    %v624 = vsel %vm616, %v607, %v623
    %v625 = vsel %vm615, %v622, %v624
    %v626 = vsel %vm614, %v604, %v607
    %v627 = vsel %vm617, %v613, 1326507024
    %v628 = vsel %vm616, %v610, %v627
    %v629 = vsel %vm615, %v626, %v628
    %v630 = vshll.u32 %v590, 8
    %v631 = vmul.u32.u64.compose %v630, %v629
    %v632 = vextract.low.u32 %v631
    %v633 = vextract.high.u32 %v631
    %v634 = vmul.u32.u64.compose %v630, %v625
    %v635 = vextract.low.u32 %v634
    %v636 = vextract.high.u32 %v634
    %v637 = vmul.u32 %v630, %v621
    %v638 = vadd.s32 %v633, %v635
    %vm639 = vc.u32 %v633, %v635
    %v640 = vadd.s32 %v636, 1
    %v641 = vsel %vm639, %v640, %v636
    %v642 = vadd.s32 %v637, %v641
    %v643 = vadd.s32 %v642, 536870912
    %v644 = vshrl.u32 %v643, 30
    %v645 = vshll.u32 %v644, 30
    %v646 = vsub.s32 %v642, %v645
    %vm647 = vcmp.lt.s32.totalorder %v646, 0
    %v648 = vsub.s32 0, %v646
    %v649 = vsel %vm647, %v648, %v646
    %v650 = vclz %v649
    %v651 = vsub.s32 %v650, 2
    %vm652 = vcmp.gt.s32.totalorder 0, %v651
    %v653 = vsel %vm652, 0, %v651
    %v654 = vsub.s32 32, %v653
    %v655 = vshll.u32 %v646, %v653
    %v656 = vshrl.u32 %v638, %v654
    %v657 = vor.u32 %v655, %v656
    %v658 = vsub.s32 4294967266, %v653
    %v659 = vadd.s32 %v658, 127
    %v660 = vshll.u32 %v659, 23
    %v661 = vor.u32 4788187, %v660
    %v662 = vand.u32 2147483647, %v661
    %v664 = vcvt.s32.f32 %v657
    %v665 = vmul.f32 %v664, %v662
    %v666 = vxor.u32 %v665, 2147483648
    %v667 = vsel %vm584, %v666, %v665
    %v668 = vsub.s32 4, %v644
    %v669 = vsel %vm584, %v668, %v644
    %v670 = vsel %vm583, %v370, %v667
    %v671 = vsel %vm583, 0, %v669
    %v672 = vcosq.f32.pop %v670
    %v673 = vsinq.f32.pop %v670
    %vm674 = vweird.f32 %v370
    %v675 = vand.u32 %v671, 3
    %vm676 = vcmp.lt.s32.totalorder %v675, 2
    %vm677 = vcmp.eq.s32.totalorder %v675, 0
    %v678 = vxor.u32 %v673, 2147483648
    %v679 = vsel %vm677, %v672, %v678
    %vm680 = vcmp.eq.s32.totalorder %v675, 2
    %v681 = vxor.u32 %v672, 2147483648
    %v682 = vsel %vm680, %v681, %v673
    %v683 = vsel %vm676, %v679, %v682
    %v684 = vsel %vm674, nan, %v683
    %v685 = vand.u32 2147483647, %v371
    %vm686 = vcmp.le.f32.partialorder %v685, 0.7853982
    %vm687 = vcmp.lt.s32.totalorder %v371, 0
    %v688 = vand.u32 %v371, 2139095040
    %v689 = vshrl.u32 %v688, 23
    %v690 = vsub.s32 %v689, 127
    %v691 = vand.u32 2147483647, %v371
    %v692 = vand.u32 %v691, 8388607
    %v693 = vor.u32 %v692, 8388608
    %v694 = vsub.s32 0, %v693
    %v695 = vadd.s32 %v690, 1
    %vm696 = vcmp.gt.s32.totalorder %v695, 0
    %v697 = vsel %vm696, %v695, 0
    %v698 = vshrl.u32 %v697, 5
    %v699 = vand.u32 %v697, 31
    %v700 = vsub.s32 32, %v699
    %v701 = vshrl.u32 683565275, %v700
    %v702 = vshll.u32 683565275, %v699
    %v703 = vshrl.u32 2475754826, %v700
    %v704 = vor.u32 %v702, %v703
    %v705 = vshll.u32 2475754826, %v699
    %v706 = vshrl.u32 2131351028, %v700
    %v707 = vor.u32 %v705, %v706
    %v708 = vshll.u32 2131351028, %v699
    %v709 = vshrl.u32 2102212464, %v700
    %v710 = vor.u32 %v708, %v709
    %v711 = vshll.u32 2102212464, %v699
    %v712 = vshrl.u32 920167782, %v700
    %v713 = vor.u32 %v711, %v712
    %v714 = vshll.u32 920167782, %v699
    %v715 = vshrl.u32 1326507024, %v700
    %v716 = vor.u32 %v714, %v715
    %vm717 = vcmp.lt.s32.totalorder %v698, 1
    %vm718 = vcmp.lt.s32.totalorder %v698, 2
    %vm719 = vcmp.lt.s32.totalorder %v698, 3
    %vm720 = vcmp.lt.s32.totalorder %v698, 4
    %v721 = vsel %vm717, %v701, %v704
    %v722 = vsel %vm720, %v710, 2102212464
    %v723 = vsel %vm719, %v707, %v722
    %v724 = vsel %vm718, %v721, %v723
    %v725 = vsel %vm717, %v704, %v707
    %v726 = vsel %vm720, %v713, 920167782
    %v727 = vsel %vm719, %v710, %v726
    %v728 = vsel %vm718, %v725, %v727
    %v729 = vsel %vm717, %v707, %v710
    %v730 = vsel %vm720, %v716, 1326507024
    %v731 = vsel %vm719, %v713, %v730
    %v732 = vsel %vm718, %v729, %v731
    %v733 = vshll.u32 %v693, 8
    %v734 = vmul.u32.u64.compose %v733, %v732
    %v735 = vextract.low.u32 %v734
    %v736 = vextract.high.u32 %v734
    %v737 = vmul.u32.u64.compose %v733, %v728
    %v738 = vextract.low.u32 %v737
    %v739 = vextract.high.u32 %v737
    %v740 = vmul.u32 %v733, %v724
    %v741 = vadd.s32 %v736, %v738
    %vm742 = vc.u32 %v736, %v738
    %v743 = vadd.s32 %v739, 1
    %v744 = vsel %vm742, %v743, %v739
    %v745 = vadd.s32 %v740, %v744
    %v746 = vadd.s32 %v745, 536870912
    %v747 = vshrl.u32 %v746, 30
    %v748 = vshll.u32 %v747, 30
    %v749 = vsub.s32 %v745, %v748
    %vm750 = vcmp.lt.s32.totalorder %v749, 0
    %v751 = vsub.s32 0, %v749
    %v752 = vsel %vm750, %v751, %v749
    %v753 = vclz %v752
    %v754 = vsub.s32 %v753, 2
    %vm755 = vcmp.gt.s32.totalorder 0, %v754
    %v756 = vsel %vm755, 0, %v754
    %v757 = vsub.s32 32, %v756
    %v758 = vshll.u32 %v749, %v756
    %v759 = vshrl.u32 %v741, %v757
    %v760 = vor.u32 %v758, %v759
    %v761 = vsub.s32 4294967266, %v756
    %v762 = vadd.s32 %v761, 127
    %v763 = vshll.u32 %v762, 23
    %v764 = vor.u32 4788187, %v763
    %v765 = vand.u32 2147483647, %v764
    %v767 = vcvt.s32.f32 %v760
    %v768 = vmul.f32 %v767, %v765
    %v769 = vxor.u32 %v768, 2147483648
    %v770 = vsel %vm687, %v769, %v768
    %v771 = vsub.s32 4, %v747
    %v772 = vsel %vm687, %v771, %v747
    %v773 = vsel %vm686, %v371, %v770
    %v774 = vsel %vm686, 0, %v772
    %v775 = vcosq.f32.pop %v773
    %v776 = vsinq.f32.pop %v773
    %vm777 = vweird.f32 %v371
    %v778 = vand.u32 %v774, 3
    %vm779 = vcmp.lt.s32.totalorder %v778, 2
    %vm780 = vcmp.eq.s32.totalorder %v778, 0
    %v781 = vxor.u32 %v776, 2147483648
    %v782 = vsel %vm780, %v775, %v781
    %vm783 = vcmp.eq.s32.totalorder %v778, 2
    %v784 = vxor.u32 %v775, 2147483648
    %v785 = vsel %vm783, %v784, %v776
    %v786 = vsel %vm779, %v782, %v785
    %v787 = vsel %vm777, nan, %v786
    %v788 = vand.u32 2147483647, %v372
    %vm789 = vcmp.le.f32.partialorder %v788, 0.7853982
    %vm790 = vcmp.lt.s32.totalorder %v372, 0
    %v791 = vand.u32 %v372, 2139095040
    %v792 = vshrl.u32 %v791, 23
    %v793 = vsub.s32 %v792, 127
    %v794 = vand.u32 2147483647, %v372
    %v795 = vand.u32 %v794, 8388607
    %v796 = vor.u32 %v795, 8388608
    %v797 = vsub.s32 0, %v796
    %v798 = vadd.s32 %v793, 1
    %vm799 = vcmp.gt.s32.totalorder %v798, 0
    %v800 = vsel %vm799, %v798, 0
    %v801 = vshrl.u32 %v800, 5
    %v802 = vand.u32 %v800, 31
    %v803 = vsub.s32 32, %v802
    %v804 = vshrl.u32 683565275, %v803
    %v805 = vshll.u32 683565275, %v802
    %v806 = vshrl.u32 2475754826, %v803
    %v807 = vor.u32 %v805, %v806
    %v808 = vshll.u32 2475754826, %v802
    %v809 = vshrl.u32 2131351028, %v803
    %v810 = vor.u32 %v808, %v809
    %v811 = vshll.u32 2131351028, %v802
    %v812 = vshrl.u32 2102212464, %v803
    %v813 = vor.u32 %v811, %v812
    %v814 = vshll.u32 2102212464, %v802
    %v815 = vshrl.u32 920167782, %v803
    %v816 = vor.u32 %v814, %v815
    %v817 = vshll.u32 920167782, %v802
    %v818 = vshrl.u32 1326507024, %v803
    %v819 = vor.u32 %v817, %v818
    %vm820 = vcmp.lt.s32.totalorder %v801, 1
    %vm821 = vcmp.lt.s32.totalorder %v801, 2
    %vm822 = vcmp.lt.s32.totalorder %v801, 3
    %vm823 = vcmp.lt.s32.totalorder %v801, 4
    %v824 = vsel %vm820, %v804, %v807
    %v825 = vsel %vm823, %v813, 2102212464
    %v826 = vsel %vm822, %v810, %v825
    %v827 = vsel %vm821, %v824, %v826
    %v828 = vsel %vm820, %v807, %v810
    %v829 = vsel %vm823, %v816, 920167782
    %v830 = vsel %vm822, %v813, %v829
    %v831 = vsel %vm821, %v828, %v830
    %v832 = vsel %vm820, %v810, %v813
    %v833 = vsel %vm823, %v819, 1326507024
    %v834 = vsel %vm822, %v816, %v833
    %v835 = vsel %vm821, %v832, %v834
    %v836 = vshll.u32 %v796, 8
    %v837 = vmul.u32.u64.compose %v836, %v835
    %v838 = vextract.low.u32 %v837
    %v839 = vextract.high.u32 %v837
    %v840 = vmul.u32.u64.compose %v836, %v831
    %v841 = vextract.low.u32 %v840
    %v842 = vextract.high.u32 %v840
    %v843 = vmul.u32 %v836, %v827
    %v844 = vadd.s32 %v839, %v841
    %vm845 = vc.u32 %v839, %v841
    %v846 = vadd.s32 %v842, 1
    %v847 = vsel %vm845, %v846, %v842
    %v848 = vadd.s32 %v843, %v847
    %v849 = vadd.s32 %v848, 536870912
    %v850 = vshrl.u32 %v849, 30
    %v851 = vshll.u32 %v850, 30
    %v852 = vsub.s32 %v848, %v851
    %vm853 = vcmp.lt.s32.totalorder %v852, 0
    %v854 = vsub.s32 0, %v852
    %v855 = vsel %vm853, %v854, %v852
    %v856 = vclz %v855
    %v857 = vsub.s32 %v856, 2
    %vm858 = vcmp.gt.s32.totalorder 0, %v857
    %v859 = vsel %vm858, 0, %v857
    %v860 = vsub.s32 32, %v859
    %v861 = vshll.u32 %v852, %v859
    %v862 = vshrl.u32 %v844, %v860
    %v863 = vor.u32 %v861, %v862
    %v864 = vsub.s32 4294967266, %v859
    %v865 = vadd.s32 %v864, 127
    %v866 = vshll.u32 %v865, 23
    %v867 = vor.u32 4788187, %v866
    %v868 = vand.u32 2147483647, %v867
    %v870 = vcvt.s32.f32 %v863
    %v871 = vmul.f32 %v870, %v868
    %v872 = vxor.u32 %v871, 2147483648
    %v873 = vsel %vm790, %v872, %v871
    %v874 = vsub.s32 4, %v850
    %v875 = vsel %vm790, %v874, %v850
    %v876 = vsel %vm789, %v372, %v873
    %v877 = vsel %vm789, 0, %v875
    %v878 = vcosq.f32.pop %v876
    %v879 = vsinq.f32.pop %v876
    %vm880 = vweird.f32 %v372
    %v881 = vand.u32 %v877, 3
    %vm882 = vcmp.lt.s32.totalorder %v881, 2
    %vm883 = vcmp.eq.s32.totalorder %v881, 0
    %v884 = vxor.u32 %v879, 2147483648
    %v885 = vsel %vm883, %v878, %v884
    %vm886 = vcmp.eq.s32.totalorder %v881, 2
    %v887 = vxor.u32 %v878, 2147483648
    %v888 = vsel %vm886, %v887, %v879
    %v889 = vsel %vm882, %v885, %v888
    %v890 = vsel %vm880, nan, %v889
    %v891 = vand.u32 2147483647, %v373
    %vm892 = vcmp.le.f32.partialorder %v891, 0.7853982
    %vm893 = vcmp.lt.s32.totalorder %v373, 0
    %v894 = vand.u32 %v373, 2139095040
    %v895 = vshrl.u32 %v894, 23
    %v896 = vsub.s32 %v895, 127
    %v897 = vand.u32 2147483647, %v373
    %v898 = vand.u32 %v897, 8388607
    %v899 = vor.u32 %v898, 8388608
    %v900 = vsub.s32 0, %v899
    %v901 = vadd.s32 %v896, 1
    %vm902 = vcmp.gt.s32.totalorder %v901, 0
    %v903 = vsel %vm902, %v901, 0
    %v904 = vshrl.u32 %v903, 5
    %v905 = vand.u32 %v903, 31
    %v906 = vsub.s32 32, %v905
    %v907 = vshrl.u32 683565275, %v906
    %v908 = vshll.u32 683565275, %v905
    %v909 = vshrl.u32 2475754826, %v906
    %v910 = vor.u32 %v908, %v909
    %v911 = vshll.u32 2475754826, %v905
    %v912 = vshrl.u32 2131351028, %v906
    %v913 = vor.u32 %v911, %v912
    %v914 = vshll.u32 2131351028, %v905
    %v915 = vshrl.u32 2102212464, %v906
    %v916 = vor.u32 %v914, %v915
    %v917 = vshll.u32 2102212464, %v905
    %v918 = vshrl.u32 920167782, %v906
    %v919 = vor.u32 %v917, %v918
    %v920 = vshll.u32 920167782, %v905
    %v921 = vshrl.u32 1326507024, %v906
    %v922 = vor.u32 %v920, %v921
    %vm923 = vcmp.lt.s32.totalorder %v904, 1
    %vm924 = vcmp.lt.s32.totalorder %v904, 2
    %vm925 = vcmp.lt.s32.totalorder %v904, 3
    %vm926 = vcmp.lt.s32.totalorder %v904, 4
    %v927 = vsel %vm923, %v907, %v910
    %v928 = vsel %vm926, %v916, 2102212464
    %v929 = vsel %vm925, %v913, %v928
    %v930 = vsel %vm924, %v927, %v929
    %v931 = vsel %vm923, %v910, %v913
    %v932 = vsel %vm926, %v919, 920167782
    %v933 = vsel %vm925, %v916, %v932
    %v934 = vsel %vm924, %v931, %v933
    %v935 = vsel %vm923, %v913, %v916
    %v936 = vsel %vm926, %v922, 1326507024
    %v937 = vsel %vm925, %v919, %v936
    %v938 = vsel %vm924, %v935, %v937
    %v939 = vshll.u32 %v899, 8
    %v940 = vmul.u32.u64.compose %v939, %v938
    %v941 = vextract.low.u32 %v940
    %v942 = vextract.high.u32 %v940
    %v943 = vmul.u32.u64.compose %v939, %v934
    %v944 = vextract.low.u32 %v943
    %v945 = vextract.high.u32 %v943
    %v946 = vmul.u32 %v939, %v930
    %v947 = vadd.s32 %v942, %v944
    %vm948 = vc.u32 %v942, %v944
    %v949 = vadd.s32 %v945, 1
    %v950 = vsel %vm948, %v949, %v945
    %v951 = vadd.s32 %v946, %v950
    %v952 = vadd.s32 %v951, 536870912
    %v953 = vshrl.u32 %v952, 30
    %v954 = vshll.u32 %v953, 30
    %v955 = vsub.s32 %v951, %v954
    %vm956 = vcmp.lt.s32.totalorder %v955, 0
    %v957 = vsub.s32 0, %v955
    %v958 = vsel %vm956, %v957, %v955
    %v959 = vclz %v958
    %v960 = vsub.s32 %v959, 2
    %vm961 = vcmp.gt.s32.totalorder 0, %v960
    %v962 = vsel %vm961, 0, %v960
    %v963 = vsub.s32 32, %v962
    %v964 = vshll.u32 %v955, %v962
    %v965 = vshrl.u32 %v947, %v963
    %v966 = vor.u32 %v964, %v965
    %v967 = vsub.s32 4294967266, %v962
    %v968 = vadd.s32 %v967, 127
    %v969 = vshll.u32 %v968, 23
    %v970 = vor.u32 4788187, %v969
    %v971 = vand.u32 2147483647, %v970
    %v973 = vcvt.s32.f32 %v966
    %v974 = vmul.f32 %v973, %v971
    %v975 = vxor.u32 %v974, 2147483648
    %v976 = vsel %vm893, %v975, %v974
    %v977 = vsub.s32 4, %v953
    %v978 = vsel %vm893, %v977, %v953
    %v979 = vsel %vm892, %v373, %v976
    %v980 = vsel %vm892, 0, %v978
    %v981 = vcosq.f32.pop %v979
    %v982 = vsinq.f32.pop %v979
    %vm983 = vweird.f32 %v373
    %v984 = vand.u32 %v980, 3
    %vm985 = vcmp.lt.s32.totalorder %v984, 2
    %vm986 = vcmp.eq.s32.totalorder %v984, 0
    %v987 = vxor.u32 %v982, 2147483648
    %v988 = vsel %vm986, %v981, %v987
    %vm989 = vcmp.eq.s32.totalorder %v984, 2
    %v990 = vxor.u32 %v981, 2147483648
    %v991 = vsel %vm989, %v990, %v982
    %v992 = vsel %vm985, %v988, %v991
    %v993 = vsel %vm983, nan, %v992
    %v994 = vand.u32 2147483647, %v374
    %vm995 = vcmp.le.f32.partialorder %v994, 0.7853982
    %vm996 = vcmp.lt.s32.totalorder %v374, 0
    %v997 = vand.u32 %v374, 2139095040
    %v998 = vshrl.u32 %v997, 23
    %v999 = vsub.s32 %v998, 127
    %v1000 = vand.u32 2147483647, %v374
    %v1001 = vand.u32 %v1000, 8388607
    %v1002 = vor.u32 %v1001, 8388608
    %v1003 = vsub.s32 0, %v1002
    %v1004 = vadd.s32 %v999, 1
    %vm1005 = vcmp.gt.s32.totalorder %v1004, 0
    %v1006 = vsel %vm1005, %v1004, 0
    %v1007 = vshrl.u32 %v1006, 5
    %v1008 = vand.u32 %v1006, 31
    %v1009 = vsub.s32 32, %v1008
    %v1010 = vshrl.u32 683565275, %v1009
    %v1011 = vshll.u32 683565275, %v1008
    %v1012 = vshrl.u32 2475754826, %v1009
    %v1013 = vor.u32 %v1011, %v1012
    %v1014 = vshll.u32 2475754826, %v1008
    %v1015 = vshrl.u32 2131351028, %v1009
    %v1016 = vor.u32 %v1014, %v1015
    %v1017 = vshll.u32 2131351028, %v1008
    %v1018 = vshrl.u32 2102212464, %v1009
    %v1019 = vor.u32 %v1017, %v1018
    %v1020 = vshll.u32 2102212464, %v1008
    %v1021 = vshrl.u32 920167782, %v1009
    %v1022 = vor.u32 %v1020, %v1021
    %v1023 = vshll.u32 920167782, %v1008
    %v1024 = vshrl.u32 1326507024, %v1009
    %v1025 = vor.u32 %v1023, %v1024
    %vm1026 = vcmp.lt.s32.totalorder %v1007, 1
    %vm1027 = vcmp.lt.s32.totalorder %v1007, 2
    %vm1028 = vcmp.lt.s32.totalorder %v1007, 3
    %vm1029 = vcmp.lt.s32.totalorder %v1007, 4
    %v1030 = vsel %vm1026, %v1010, %v1013
    %v1031 = vsel %vm1029, %v1019, 2102212464
    %v1032 = vsel %vm1028, %v1016, %v1031
    %v1033 = vsel %vm1027, %v1030, %v1032
    %v1034 = vsel %vm1026, %v1013, %v1016
    %v1035 = vsel %vm1029, %v1022, 920167782
    %v1036 = vsel %vm1028, %v1019, %v1035
    %v1037 = vsel %vm1027, %v1034, %v1036
    %v1038 = vsel %vm1026, %v1016, %v1019
    %v1039 = vsel %vm1029, %v1025, 1326507024
    %v1040 = vsel %vm1028, %v1022, %v1039
    %v1041 = vsel %vm1027, %v1038, %v1040
    %v1042 = vshll.u32 %v1002, 8
    %v1043 = vmul.u32.u64.compose %v1042, %v1041
    %v1044 = vextract.low.u32 %v1043
    %v1045 = vextract.high.u32 %v1043
    %v1046 = vmul.u32.u64.compose %v1042, %v1037
    %v1047 = vextract.low.u32 %v1046
    %v1048 = vextract.high.u32 %v1046
    %v1049 = vmul.u32 %v1042, %v1033
    %v1050 = vadd.s32 %v1045, %v1047
    %vm1051 = vc.u32 %v1045, %v1047
    %v1052 = vadd.s32 %v1048, 1
    %v1053 = vsel %vm1051, %v1052, %v1048
    %v1054 = vadd.s32 %v1049, %v1053
    %v1055 = vadd.s32 %v1054, 536870912
    %v1056 = vshrl.u32 %v1055, 30
    %v1057 = vshll.u32 %v1056, 30
    %v1058 = vsub.s32 %v1054, %v1057
    %vm1059 = vcmp.lt.s32.totalorder %v1058, 0
    %v1060 = vsub.s32 0, %v1058
    %v1061 = vsel %vm1059, %v1060, %v1058
    %v1062 = vclz %v1061
    %v1063 = vsub.s32 %v1062, 2
    %vm1064 = vcmp.gt.s32.totalorder 0, %v1063
    %v1065 = vsel %vm1064, 0, %v1063
    %v1066 = vsub.s32 32, %v1065
    %v1067 = vshll.u32 %v1058, %v1065
    %v1068 = vshrl.u32 %v1050, %v1066
    %v1069 = vor.u32 %v1067, %v1068
    %v1070 = vsub.s32 4294967266, %v1065
    %v1071 = vadd.s32 %v1070, 127
    %v1072 = vshll.u32 %v1071, 23
    %v1073 = vor.u32 4788187, %v1072
    %v1074 = vand.u32 2147483647, %v1073
    %v1076 = vcvt.s32.f32 %v1069
    %v1077 = vmul.f32 %v1076, %v1074
    %v1078 = vxor.u32 %v1077, 2147483648
    %v1079 = vsel %vm996, %v1078, %v1077
    %v1080 = vsub.s32 4, %v1056
    %v1081 = vsel %vm996, %v1080, %v1056
    %v1082 = vsel %vm995, %v374, %v1079
    %v1083 = vsel %vm995, 0, %v1081
    %v1084 = vcosq.f32.pop %v1082
    %v1085 = vsinq.f32.pop %v1082
    %vm1086 = vweird.f32 %v374
    %v1087 = vand.u32 %v1083, 3
    %vm1088 = vcmp.lt.s32.totalorder %v1087, 2
    %vm1089 = vcmp.eq.s32.totalorder %v1087, 0
    %v1090 = vxor.u32 %v1085, 2147483648
    %v1091 = vsel %vm1089, %v1084, %v1090
    %vm1092 = vcmp.eq.s32.totalorder %v1087, 2
    %v1093 = vxor.u32 %v1084, 2147483648
    %v1094 = vsel %vm1092, %v1093, %v1085
    %v1095 = vsel %vm1088, %v1091, %v1094
    %v1096 = vsel %vm1086, nan, %v1095
    %v1097 = vand.u32 2147483647, %v375
    %vm1098 = vcmp.le.f32.partialorder %v1097, 0.7853982
    %vm1099 = vcmp.lt.s32.totalorder %v375, 0
    %v1100 = vand.u32 %v375, 2139095040
    %v1101 = vshrl.u32 %v1100, 23
    %v1102 = vsub.s32 %v1101, 127
    %v1103 = vand.u32 2147483647, %v375
    %v1104 = vand.u32 %v1103, 8388607
    %v1105 = vor.u32 %v1104, 8388608
    %v1106 = vsub.s32 0, %v1105
    %v1107 = vadd.s32 %v1102, 1
    %vm1108 = vcmp.gt.s32.totalorder %v1107, 0
    %v1109 = vsel %vm1108, %v1107, 0
    %v1110 = vshrl.u32 %v1109, 5
    %v1111 = vand.u32 %v1109, 31
    %v1112 = vsub.s32 32, %v1111
    %v1113 = vshrl.u32 683565275, %v1112
    %v1114 = vshll.u32 683565275, %v1111
    %v1115 = vshrl.u32 2475754826, %v1112
    %v1116 = vor.u32 %v1114, %v1115
    %v1117 = vshll.u32 2475754826, %v1111
    %v1118 = vshrl.u32 2131351028, %v1112
    %v1119 = vor.u32 %v1117, %v1118
    %v1120 = vshll.u32 2131351028, %v1111
    %v1121 = vshrl.u32 2102212464, %v1112
    %v1122 = vor.u32 %v1120, %v1121
    %v1123 = vshll.u32 2102212464, %v1111
    %v1124 = vshrl.u32 920167782, %v1112
    %v1125 = vor.u32 %v1123, %v1124
    %v1126 = vshll.u32 920167782, %v1111
    %v1127 = vshrl.u32 1326507024, %v1112
    %v1128 = vor.u32 %v1126, %v1127
    %vm1129 = vcmp.lt.s32.totalorder %v1110, 1
    %vm1130 = vcmp.lt.s32.totalorder %v1110, 2
    %vm1131 = vcmp.lt.s32.totalorder %v1110, 3
    %vm1132 = vcmp.lt.s32.totalorder %v1110, 4
    %v1133 = vsel %vm1129, %v1113, %v1116
    %v1134 = vsel %vm1132, %v1122, 2102212464
    %v1135 = vsel %vm1131, %v1119, %v1134
    %v1136 = vsel %vm1130, %v1133, %v1135
    %v1137 = vsel %vm1129, %v1116, %v1119
    %v1138 = vsel %vm1132, %v1125, 920167782
    %v1139 = vsel %vm1131, %v1122, %v1138
    %v1140 = vsel %vm1130, %v1137, %v1139
    %v1141 = vsel %vm1129, %v1119, %v1122
    %v1142 = vsel %vm1132, %v1128, 1326507024
    %v1143 = vsel %vm1131, %v1125, %v1142
    %v1144 = vsel %vm1130, %v1141, %v1143
    %v1145 = vshll.u32 %v1105, 8
    %v1146 = vmul.u32.u64.compose %v1145, %v1144
    %v1147 = vextract.low.u32 %v1146
    %v1148 = vextract.high.u32 %v1146
    %v1149 = vmul.u32.u64.compose %v1145, %v1140
    %v1150 = vextract.low.u32 %v1149
    %v1151 = vextract.high.u32 %v1149
    %v1152 = vmul.u32 %v1145, %v1136
    %v1153 = vadd.s32 %v1148, %v1150
    %vm1154 = vc.u32 %v1148, %v1150
    %v1155 = vadd.s32 %v1151, 1
    %v1156 = vsel %vm1154, %v1155, %v1151
    %v1157 = vadd.s32 %v1152, %v1156
    %v1158 = vadd.s32 %v1157, 536870912
    %v1159 = vshrl.u32 %v1158, 30
    %v1160 = vshll.u32 %v1159, 30
    %v1161 = vsub.s32 %v1157, %v1160
    %vm1162 = vcmp.lt.s32.totalorder %v1161, 0
    %v1163 = vsub.s32 0, %v1161
    %v1164 = vsel %vm1162, %v1163, %v1161
    %v1165 = vclz %v1164
    %v1166 = vsub.s32 %v1165, 2
    %vm1167 = vcmp.gt.s32.totalorder 0, %v1166
    %v1168 = vsel %vm1167, 0, %v1166
    %v1169 = vsub.s32 32, %v1168
    %v1170 = vshll.u32 %v1161, %v1168
    %v1171 = vshrl.u32 %v1153, %v1169
    %v1172 = vor.u32 %v1170, %v1171
    %v1173 = vsub.s32 4294967266, %v1168
    %v1174 = vadd.s32 %v1173, 127
    %v1175 = vshll.u32 %v1174, 23
    %v1176 = vor.u32 4788187, %v1175
    %v1177 = vand.u32 2147483647, %v1176
    %v1179 = vcvt.s32.f32 %v1172
    %v1180 = vmul.f32 %v1179, %v1177
    %v1181 = vxor.u32 %v1180, 2147483648
    %v1182 = vsel %vm1099, %v1181, %v1180
    %v1183 = vsub.s32 4, %v1159
    %v1184 = vsel %vm1099, %v1183, %v1159
    %v1185 = vsel %vm1098, %v375, %v1182
    %v1186 = vsel %vm1098, 0, %v1184
    %v1187 = vcosq.f32.pop %v1185
    %v1188 = vsinq.f32.pop %v1185
    %vm1189 = vweird.f32 %v375
    %v1190 = vand.u32 %v1186, 3
    %vm1191 = vcmp.lt.s32.totalorder %v1190, 2
    %vm1192 = vcmp.eq.s32.totalorder %v1190, 0
    %v1193 = vxor.u32 %v1188, 2147483648
    %v1194 = vsel %vm1192, %v1187, %v1193
    %vm1195 = vcmp.eq.s32.totalorder %v1190, 2
    %v1196 = vxor.u32 %v1187, 2147483648
    %v1197 = vsel %vm1195, %v1196, %v1188
    %v1198 = vsel %vm1191, %v1194, %v1197
    %v1199 = vsel %vm1189, nan, %v1198
    %v1200 = vmul.f32 %v318, %v478
    %v1201 = vmul.f32 %v325, %v581
    %v1202 = vmul.f32 %v332, %v684
    %v1203 = vmul.f32 %v339, %v787
    %v1204 = vmul.f32 %v346, %v890
    %v1205 = vmul.f32 %v353, %v993
    %v1206 = vmul.f32 %v360, %v1096
    %v1207 = vmul.f32 %v367, %v1199
    %v1208 = vstv %s42
    %v1209 = vmul.f32 %v1200, %v1208
    %v1210 = vmul.f32 %v1201, %v1208
    %v1211 = vmul.f32 %v1202, %v1208
    %v1212 = vmul.f32 %v1203, %v1208
    %v1213 = vmul.f32 %v1204, %v1208
    %v1214 = vmul.f32 %v1205, %v1208
    %v1215 = vmul.f32 %v1206, %v1208
    %v1216 = vmul.f32 %v1207, %v1208
    %v1225 = vcombine.low %v1209, %v1210
    %v1226 = vcombine.low %v1211, %v1212
    %v1228 = vunpack.c.l.s4 1983009808
    %v1229 = vunpack.c.0.s8 %v1228
    %v1230 = vlaneseq
    %v1231 = vshrl.u32 %v1230, 7
    %v1232 = vsub.s32 %v1229, %v1231
    %v1233 = vrot.slane %v1225, %v1232
    %v1235 = vunpack.c.l.s4 1983009808
    %v1236 = vunpack.c.0.s8 %v1235
    %v1237 = vlaneseq
    %v1238 = vshrl.u32 %v1237, 7
    %v1239 = vsub.s32 %v1236, %v1238
    %v1240 = vrot.slane %v1226, %v1239
    %v1241 = vcombine.low %v1233, %v1240
    %v1242 = vcombine.low %v1213, %v1214
    %v1243 = vcombine.low %v1215, %v1216
    %v1245 = vunpack.c.l.s4 1983009808
    %v1246 = vunpack.c.0.s8 %v1245
    %v1247 = vlaneseq
    %v1248 = vshrl.u32 %v1247, 7
    %v1249 = vsub.s32 %v1246, %v1248
    %v1250 = vrot.slane %v1242, %v1249
    %v1252 = vunpack.c.l.s4 1983009808
    %v1253 = vunpack.c.0.s8 %v1252
    %v1254 = vlaneseq
    %v1255 = vshrl.u32 %v1254, 7
    %v1256 = vsub.s32 %v1253, %v1255
    %v1257 = vrot.slane %v1243, %v1256
    %v1258 = vcombine.low %v1250, %v1257
    %v1261 = vadd.f32 %v64, %v1241
    %v1262 = vadd.f32 %v65, %v1258
    %v1263 = vstv %s41
    %v1264 = vadd.f32 %v1261, %v1263
    %v1265 = vadd.f32 %v1262, %v1263
    %v1269 = vunpack.c.l.s4 1966171168
    %v1270 = vunpack.c.0.s8 %v1269
    %v1271 = vlaneseq
    %v1272 = vshrl.u32 %v1271, 7
    %v1273 = vsub.s32 %v1270, %v1272
    %v1274 = vrot.slane %v1264, %v1273
    %v1276 = vunpack.c.l.s4 1966171168
    %v1277 = vunpack.c.0.s8 %v1276
    %v1278 = vlaneseq
    %v1279 = vshrl.u32 %v1278, 7
    %v1280 = vsub.s32 %v1277, %v1279
    %v1281 = vrot.slane %v1265, %v1280
    %v1282 = vcombine.low %v1274, %v1281
    %1284 = vst [vmem:[#allocation8] ss:$2 sm:$0xff] %v1282
    %v1285 = vand.u32 2147483647, %v368
    %vm1286 = vcmp.le.f32.partialorder %v1285, 0.7853982
    %vm1287 = vcmp.lt.s32.totalorder %v368, 0
    %v1288 = vand.u32 %v368, 2139095040
    %v1289 = vshrl.u32 %v1288, 23
    %v1290 = vsub.s32 %v1289, 127
    %v1291 = vand.u32 2147483647, %v368
    %v1292 = vand.u32 %v1291, 8388607
    %v1293 = vor.u32 %v1292, 8388608
    %v1294 = vsub.s32 0, %v1293
    %v1295 = vadd.s32 %v1290, 1
    %vm1296 = vcmp.gt.s32.totalorder %v1295, 0
    %v1297 = vsel %vm1296, %v1295, 0
    %v1298 = vshrl.u32 %v1297, 5
    %v1299 = vand.u32 %v1297, 31
    %v1300 = vsub.s32 32, %v1299
    %v1301 = vshrl.u32 683565275, %v1300
    %v1302 = vshll.u32 683565275, %v1299
    %v1303 = vshrl.u32 2475754826, %v1300
    %v1304 = vor.u32 %v1302, %v1303
    %v1305 = vshll.u32 2475754826, %v1299
    %v1306 = vshrl.u32 2131351028, %v1300
    %v1307 = vor.u32 %v1305, %v1306
    %v1308 = vshll.u32 2131351028, %v1299
    %v1309 = vshrl.u32 2102212464, %v1300
    %v1310 = vor.u32 %v1308, %v1309
    %v1311 = vshll.u32 2102212464, %v1299
    %v1312 = vshrl.u32 920167782, %v1300
    %v1313 = vor.u32 %v1311, %v1312
    %v1314 = vshll.u32 920167782, %v1299
    %v1315 = vshrl.u32 1326507024, %v1300
    %v1316 = vor.u32 %v1314, %v1315
    %vm1317 = vcmp.lt.s32.totalorder %v1298, 1
    %vm1318 = vcmp.lt.s32.totalorder %v1298, 2
    %vm1319 = vcmp.lt.s32.totalorder %v1298, 3
    %vm1320 = vcmp.lt.s32.totalorder %v1298, 4
    %v1321 = vsel %vm1317, %v1301, %v1304
    %v1322 = vsel %vm1320, %v1310, 2102212464
    %v1323 = vsel %vm1319, %v1307, %v1322
    %v1324 = vsel %vm1318, %v1321, %v1323
    %v1325 = vsel %vm1317, %v1304, %v1307
    %v1326 = vsel %vm1320, %v1313, 920167782
    %v1327 = vsel %vm1319, %v1310, %v1326
    %v1328 = vsel %vm1318, %v1325, %v1327
    %v1329 = vsel %vm1317, %v1307, %v1310
    %v1330 = vsel %vm1320, %v1316, 1326507024
    %v1331 = vsel %vm1319, %v1313, %v1330
    %v1332 = vsel %vm1318, %v1329, %v1331
    %v1333 = vshll.u32 %v1293, 8
    %v1334 = vmul.u32.u64.compose %v1333, %v1332
    %v1335 = vextract.low.u32 %v1334
    %v1336 = vextract.high.u32 %v1334
    %v1337 = vmul.u32.u64.compose %v1333, %v1328
    %v1338 = vextract.low.u32 %v1337
    %v1339 = vextract.high.u32 %v1337
    %v1340 = vmul.u32 %v1333, %v1324
    %v1341 = vadd.s32 %v1336, %v1338
    %vm1342 = vc.u32 %v1336, %v1338
    %v1343 = vadd.s32 %v1339, 1
    %v1344 = vsel %vm1342, %v1343, %v1339
    %v1345 = vadd.s32 %v1340, %v1344
    %v1346 = vadd.s32 %v1345, 536870912
    %v1347 = vshrl.u32 %v1346, 30
    %v1348 = vshll.u32 %v1347, 30
    %v1349 = vsub.s32 %v1345, %v1348
    %vm1350 = vcmp.lt.s32.totalorder %v1349, 0
    %v1351 = vsub.s32 0, %v1349
    %v1352 = vsel %vm1350, %v1351, %v1349
    %v1353 = vclz %v1352
    %v1354 = vsub.s32 %v1353, 2
    %vm1355 = vcmp.gt.s32.totalorder 0, %v1354
    %v1356 = vsel %vm1355, 0, %v1354
    %v1357 = vsub.s32 32, %v1356
    %v1358 = vshll.u32 %v1349, %v1356
    %v1359 = vshrl.u32 %v1341, %v1357
    %v1360 = vor.u32 %v1358, %v1359
    %v1361 = vsub.s32 4294967266, %v1356
    %v1362 = vadd.s32 %v1361, 127
    %v1363 = vshll.u32 %v1362, 23
    %v1364 = vor.u32 4788187, %v1363
    %v1365 = vand.u32 2147483647, %v1364
    %v1367 = vcvt.s32.f32 %v1360
    %v1368 = vmul.f32 %v1367, %v1365
    %v1369 = vxor.u32 %v1368, 2147483648
    %v1370 = vsel %vm1287, %v1369, %v1368
    %v1371 = vsub.s32 4, %v1347
    %v1372 = vsel %vm1287, %v1371, %v1347
    %v1373 = vsel %vm1286, %v368, %v1370
    %v1374 = vsel %vm1286, 0, %v1372
    %v1375 = vcosq.f32.pop %v1373
    %v1376 = vsinq.f32.pop %v1373
    %vm1377 = vweird.f32 %v368
    %v1378 = vadd.s32 %v1374, 3
    %v1379 = vand.u32 %v1378, 3
    %vm1380 = vcmp.lt.s32.totalorder %v1379, 2
    %vm1381 = vcmp.eq.s32.totalorder %v1379, 0
    %v1382 = vxor.u32 %v1376, 2147483648
    %v1383 = vsel %vm1381, %v1375, %v1382
    %vm1384 = vcmp.eq.s32.totalorder %v1379, 2
    %v1385 = vxor.u32 %v1375, 2147483648
    %v1386 = vsel %vm1384, %v1385, %v1376
    %v1387 = vsel %vm1380, %v1383, %v1386
    %v1388 = vsel %vm1377, nan, %v1387
    %v1389 = vand.u32 2147483647, %v369
    %vm1390 = vcmp.le.f32.partialorder %v1389, 0.7853982
    %vm1391 = vcmp.lt.s32.totalorder %v369, 0
    %v1392 = vand.u32 %v369, 2139095040
    %v1393 = vshrl.u32 %v1392, 23
    %v1394 = vsub.s32 %v1393, 127
    %v1395 = vand.u32 2147483647, %v369
    %v1396 = vand.u32 %v1395, 8388607
    %v1397 = vor.u32 %v1396, 8388608
    %v1398 = vsub.s32 0, %v1397
    %v1399 = vadd.s32 %v1394, 1
    %vm1400 = vcmp.gt.s32.totalorder %v1399, 0
    %v1401 = vsel %vm1400, %v1399, 0
    %v1402 = vshrl.u32 %v1401, 5
    %v1403 = vand.u32 %v1401, 31
    %v1404 = vsub.s32 32, %v1403
    %v1405 = vshrl.u32 683565275, %v1404
    %v1406 = vshll.u32 683565275, %v1403
    %v1407 = vshrl.u32 2475754826, %v1404
    %v1408 = vor.u32 %v1406, %v1407
    %v1409 = vshll.u32 2475754826, %v1403
    %v1410 = vshrl.u32 2131351028, %v1404
    %v1411 = vor.u32 %v1409, %v1410
    %v1412 = vshll.u32 2131351028, %v1403
    %v1413 = vshrl.u32 2102212464, %v1404
    %v1414 = vor.u32 %v1412, %v1413
    %v1415 = vshll.u32 2102212464, %v1403
    %v1416 = vshrl.u32 920167782, %v1404
    %v1417 = vor.u32 %v1415, %v1416
    %v1418 = vshll.u32 920167782, %v1403
    %v1419 = vshrl.u32 1326507024, %v1404
    %v1420 = vor.u32 %v1418, %v1419
    %vm1421 = vcmp.lt.s32.totalorder %v1402, 1
    %vm1422 = vcmp.lt.s32.totalorder %v1402, 2
    %vm1423 = vcmp.lt.s32.totalorder %v1402, 3
    %vm1424 = vcmp.lt.s32.totalorder %v1402, 4
    %v1425 = vsel %vm1421, %v1405, %v1408
    %v1426 = vsel %vm1424, %v1414, 2102212464
    %v1427 = vsel %vm1423, %v1411, %v1426
    %v1428 = vsel %vm1422, %v1425, %v1427
    %v1429 = vsel %vm1421, %v1408, %v1411
    %v1430 = vsel %vm1424, %v1417, 920167782
    %v1431 = vsel %vm1423, %v1414, %v1430
    %v1432 = vsel %vm1422, %v1429, %v1431
    %v1433 = vsel %vm1421, %v1411, %v1414
    %v1434 = vsel %vm1424, %v1420, 1326507024
    %v1435 = vsel %vm1423, %v1417, %v1434
    %v1436 = vsel %vm1422, %v1433, %v1435
    %v1437 = vshll.u32 %v1397, 8
    %v1438 = vmul.u32.u64.compose %v1437, %v1436
    %v1439 = vextract.low.u32 %v1438
    %v1440 = vextract.high.u32 %v1438
    %v1441 = vmul.u32.u64.compose %v1437, %v1432
    %v1442 = vextract.low.u32 %v1441
    %v1443 = vextract.high.u32 %v1441
    %v1444 = vmul.u32 %v1437, %v1428
    %v1445 = vadd.s32 %v1440, %v1442
    %vm1446 = vc.u32 %v1440, %v1442
    %v1447 = vadd.s32 %v1443, 1
    %v1448 = vsel %vm1446, %v1447, %v1443
    %v1449 = vadd.s32 %v1444, %v1448
    %v1450 = vadd.s32 %v1449, 536870912
    %v1451 = vshrl.u32 %v1450, 30
    %v1452 = vshll.u32 %v1451, 30
    %v1453 = vsub.s32 %v1449, %v1452
    %vm1454 = vcmp.lt.s32.totalorder %v1453, 0
    %v1455 = vsub.s32 0, %v1453
    %v1456 = vsel %vm1454, %v1455, %v1453
    %v1457 = vclz %v1456
    %v1458 = vsub.s32 %v1457, 2
    %vm1459 = vcmp.gt.s32.totalorder 0, %v1458
    %v1460 = vsel %vm1459, 0, %v1458
    %v1461 = vsub.s32 32, %v1460
    %v1462 = vshll.u32 %v1453, %v1460
    %v1463 = vshrl.u32 %v1445, %v1461
    %v1464 = vor.u32 %v1462, %v1463
    %v1465 = vsub.s32 4294967266, %v1460
    %v1466 = vadd.s32 %v1465, 127
    %v1467 = vshll.u32 %v1466, 23
    %v1468 = vor.u32 4788187, %v1467
    %v1469 = vand.u32 2147483647, %v1468
    %v1471 = vcvt.s32.f32 %v1464
    %v1472 = vmul.f32 %v1471, %v1469
    %v1473 = vxor.u32 %v1472, 2147483648
    %v1474 = vsel %vm1391, %v1473, %v1472
    %v1475 = vsub.s32 4, %v1451
    %v1476 = vsel %vm1391, %v1475, %v1451
    %v1477 = vsel %vm1390, %v369, %v1474
    %v1478 = vsel %vm1390, 0, %v1476
    %v1479 = vcosq.f32.pop %v1477
    %v1480 = vsinq.f32.pop %v1477
    %vm1481 = vweird.f32 %v369
    %v1482 = vadd.s32 %v1478, 3
    %v1483 = vand.u32 %v1482, 3
    %vm1484 = vcmp.lt.s32.totalorder %v1483, 2
    %vm1485 = vcmp.eq.s32.totalorder %v1483, 0
    %v1486 = vxor.u32 %v1480, 2147483648
    %v1487 = vsel %vm1485, %v1479, %v1486
    %vm1488 = vcmp.eq.s32.totalorder %v1483, 2
    %v1489 = vxor.u32 %v1479, 2147483648
    %v1490 = vsel %vm1488, %v1489, %v1480
    %v1491 = vsel %vm1484, %v1487, %v1490
    %v1492 = vsel %vm1481, nan, %v1491
    %v1493 = vand.u32 2147483647, %v370
    %vm1494 = vcmp.le.f32.partialorder %v1493, 0.7853982
    %vm1495 = vcmp.lt.s32.totalorder %v370, 0
    %v1496 = vand.u32 %v370, 2139095040
    %v1497 = vshrl.u32 %v1496, 23
    %v1498 = vsub.s32 %v1497, 127
    %v1499 = vand.u32 2147483647, %v370
    %v1500 = vand.u32 %v1499, 8388607
    %v1501 = vor.u32 %v1500, 8388608
    %v1502 = vsub.s32 0, %v1501
    %v1503 = vadd.s32 %v1498, 1
    %vm1504 = vcmp.gt.s32.totalorder %v1503, 0
    %v1505 = vsel %vm1504, %v1503, 0
    %v1506 = vshrl.u32 %v1505, 5
    %v1507 = vand.u32 %v1505, 31
    %v1508 = vsub.s32 32, %v1507
    %v1509 = vshrl.u32 683565275, %v1508
    %v1510 = vshll.u32 683565275, %v1507
    %v1511 = vshrl.u32 2475754826, %v1508
    %v1512 = vor.u32 %v1510, %v1511
    %v1513 = vshll.u32 2475754826, %v1507
    %v1514 = vshrl.u32 2131351028, %v1508
    %v1515 = vor.u32 %v1513, %v1514
    %v1516 = vshll.u32 2131351028, %v1507
    %v1517 = vshrl.u32 2102212464, %v1508
    %v1518 = vor.u32 %v1516, %v1517
    %v1519 = vshll.u32 2102212464, %v1507
    %v1520 = vshrl.u32 920167782, %v1508
    %v1521 = vor.u32 %v1519, %v1520
    %v1522 = vshll.u32 920167782, %v1507
    %v1523 = vshrl.u32 1326507024, %v1508
    %v1524 = vor.u32 %v1522, %v1523
    %vm1525 = vcmp.lt.s32.totalorder %v1506, 1
    %vm1526 = vcmp.lt.s32.totalorder %v1506, 2
    %vm1527 = vcmp.lt.s32.totalorder %v1506, 3
    %vm1528 = vcmp.lt.s32.totalorder %v1506, 4
    %v1529 = vsel %vm1525, %v1509, %v1512
    %v1530 = vsel %vm1528, %v1518, 2102212464
    %v1531 = vsel %vm1527, %v1515, %v1530
    %v1532 = vsel %vm1526, %v1529, %v1531
    %v1533 = vsel %vm1525, %v1512, %v1515
    %v1534 = vsel %vm1528, %v1521, 920167782
    %v1535 = vsel %vm1527, %v1518, %v1534
    %v1536 = vsel %vm1526, %v1533, %v1535
    %v1537 = vsel %vm1525, %v1515, %v1518
    %v1538 = vsel %vm1528, %v1524, 1326507024
    %v1539 = vsel %vm1527, %v1521, %v1538
    %v1540 = vsel %vm1526, %v1537, %v1539
    %v1541 = vshll.u32 %v1501, 8
    %v1542 = vmul.u32.u64.compose %v1541, %v1540
    %v1543 = vextract.low.u32 %v1542
    %v1544 = vextract.high.u32 %v1542
    %v1545 = vmul.u32.u64.compose %v1541, %v1536
    %v1546 = vextract.low.u32 %v1545
    %v1547 = vextract.high.u32 %v1545
    %v1548 = vmul.u32 %v1541, %v1532
    %v1549 = vadd.s32 %v1544, %v1546
    %vm1550 = vc.u32 %v1544, %v1546
    %v1551 = vadd.s32 %v1547, 1
    %v1552 = vsel %vm1550, %v1551, %v1547
    %v1553 = vadd.s32 %v1548, %v1552
    %v1554 = vadd.s32 %v1553, 536870912
    %v1555 = vshrl.u32 %v1554, 30
    %v1556 = vshll.u32 %v1555, 30
    %v1557 = vsub.s32 %v1553, %v1556
    %vm1558 = vcmp.lt.s32.totalorder %v1557, 0
    %v1559 = vsub.s32 0, %v1557
    %v1560 = vsel %vm1558, %v1559, %v1557
    %v1561 = vclz %v1560
    %v1562 = vsub.s32 %v1561, 2
    %vm1563 = vcmp.gt.s32.totalorder 0, %v1562
    %v1564 = vsel %vm1563, 0, %v1562
    %v1565 = vsub.s32 32, %v1564
    %v1566 = vshll.u32 %v1557, %v1564
    %v1567 = vshrl.u32 %v1549, %v1565
    %v1568 = vor.u32 %v1566, %v1567
    %v1569 = vsub.s32 4294967266, %v1564
    %v1570 = vadd.s32 %v1569, 127
    %v1571 = vshll.u32 %v1570, 23
    %v1572 = vor.u32 4788187, %v1571
    %v1573 = vand.u32 2147483647, %v1572
    %v1575 = vcvt.s32.f32 %v1568
    %v1576 = vmul.f32 %v1575, %v1573
    %v1577 = vxor.u32 %v1576, 2147483648
    %v1578 = vsel %vm1495, %v1577, %v1576
    %v1579 = vsub.s32 4, %v1555
    %v1580 = vsel %vm1495, %v1579, %v1555
    %v1581 = vsel %vm1494, %v370, %v1578
    %v1582 = vsel %vm1494, 0, %v1580
    %v1583 = vcosq.f32.pop %v1581
    %v1584 = vsinq.f32.pop %v1581
    %vm1585 = vweird.f32 %v370
    %v1586 = vadd.s32 %v1582, 3
    %v1587 = vand.u32 %v1586, 3
    %vm1588 = vcmp.lt.s32.totalorder %v1587, 2
    %vm1589 = vcmp.eq.s32.totalorder %v1587, 0
    %v1590 = vxor.u32 %v1584, 2147483648
    %v1591 = vsel %vm1589, %v1583, %v1590
    %vm1592 = vcmp.eq.s32.totalorder %v1587, 2
    %v1593 = vxor.u32 %v1583, 2147483648
    %v1594 = vsel %vm1592, %v1593, %v1584
    %v1595 = vsel %vm1588, %v1591, %v1594
    %v1596 = vsel %vm1585, nan, %v1595
    %v1597 = vand.u32 2147483647, %v371
    %vm1598 = vcmp.le.f32.partialorder %v1597, 0.7853982
    %vm1599 = vcmp.lt.s32.totalorder %v371, 0
    %v1600 = vand.u32 %v371, 2139095040
    %v1601 = vshrl.u32 %v1600, 23
    %v1602 = vsub.s32 %v1601, 127
    %v1603 = vand.u32 2147483647, %v371
    %v1604 = vand.u32 %v1603, 8388607
    %v1605 = vor.u32 %v1604, 8388608
    %v1606 = vsub.s32 0, %v1605
    %v1607 = vadd.s32 %v1602, 1
    %vm1608 = vcmp.gt.s32.totalorder %v1607, 0
    %v1609 = vsel %vm1608, %v1607, 0
    %v1610 = vshrl.u32 %v1609, 5
    %v1611 = vand.u32 %v1609, 31
    %v1612 = vsub.s32 32, %v1611
    %v1613 = vshrl.u32 683565275, %v1612
    %v1614 = vshll.u32 683565275, %v1611
    %v1615 = vshrl.u32 2475754826, %v1612
    %v1616 = vor.u32 %v1614, %v1615
    %v1617 = vshll.u32 2475754826, %v1611
    %v1618 = vshrl.u32 2131351028, %v1612
    %v1619 = vor.u32 %v1617, %v1618
    %v1620 = vshll.u32 2131351028, %v1611
    %v1621 = vshrl.u32 2102212464, %v1612
    %v1622 = vor.u32 %v1620, %v1621
    %v1623 = vshll.u32 2102212464, %v1611
    %v1624 = vshrl.u32 920167782, %v1612
    %v1625 = vor.u32 %v1623, %v1624
    %v1626 = vshll.u32 920167782, %v1611
    %v1627 = vshrl.u32 1326507024, %v1612
    %v1628 = vor.u32 %v1626, %v1627
    %vm1629 = vcmp.lt.s32.totalorder %v1610, 1
    %vm1630 = vcmp.lt.s32.totalorder %v1610, 2
    %vm1631 = vcmp.lt.s32.totalorder %v1610, 3
    %vm1632 = vcmp.lt.s32.totalorder %v1610, 4
    %v1633 = vsel %vm1629, %v1613, %v1616
    %v1634 = vsel %vm1632, %v1622, 2102212464
    %v1635 = vsel %vm1631, %v1619, %v1634
    %v1636 = vsel %vm1630, %v1633, %v1635
    %v1637 = vsel %vm1629, %v1616, %v1619
    %v1638 = vsel %vm1632, %v1625, 920167782
    %v1639 = vsel %vm1631, %v1622, %v1638
    %v1640 = vsel %vm1630, %v1637, %v1639
    %v1641 = vsel %vm1629, %v1619, %v1622
    %v1642 = vsel %vm1632, %v1628, 1326507024
    %v1643 = vsel %vm1631, %v1625, %v1642
    %v1644 = vsel %vm1630, %v1641, %v1643
    %v1645 = vshll.u32 %v1605, 8
    %v1646 = vmul.u32.u64.compose %v1645, %v1644
    %v1647 = vextract.low.u32 %v1646
    %v1648 = vextract.high.u32 %v1646
    %v1649 = vmul.u32.u64.compose %v1645, %v1640
    %v1650 = vextract.low.u32 %v1649
    %v1651 = vextract.high.u32 %v1649
    %v1652 = vmul.u32 %v1645, %v1636
    %v1653 = vadd.s32 %v1648, %v1650
    %vm1654 = vc.u32 %v1648, %v1650
    %v1655 = vadd.s32 %v1651, 1
    %v1656 = vsel %vm1654, %v1655, %v1651
    %v1657 = vadd.s32 %v1652, %v1656
    %v1658 = vadd.s32 %v1657, 536870912
    %v1659 = vshrl.u32 %v1658, 30
    %v1660 = vshll.u32 %v1659, 30
    %v1661 = vsub.s32 %v1657, %v1660
    %vm1662 = vcmp.lt.s32.totalorder %v1661, 0
    %v1663 = vsub.s32 0, %v1661
    %v1664 = vsel %vm1662, %v1663, %v1661
    %v1665 = vclz %v1664
    %v1666 = vsub.s32 %v1665, 2
    %vm1667 = vcmp.gt.s32.totalorder 0, %v1666
    %v1668 = vsel %vm1667, 0, %v1666
    %v1669 = vsub.s32 32, %v1668
    %v1670 = vshll.u32 %v1661, %v1668
    %v1671 = vshrl.u32 %v1653, %v1669
    %v1672 = vor.u32 %v1670, %v1671
    %v1673 = vsub.s32 4294967266, %v1668
    %v1674 = vadd.s32 %v1673, 127
    %v1675 = vshll.u32 %v1674, 23
    %v1676 = vor.u32 4788187, %v1675
    %v1677 = vand.u32 2147483647, %v1676
    %v1679 = vcvt.s32.f32 %v1672
    %v1680 = vmul.f32 %v1679, %v1677
    %v1681 = vxor.u32 %v1680, 2147483648
    %v1682 = vsel %vm1599, %v1681, %v1680
    %v1683 = vsub.s32 4, %v1659
    %v1684 = vsel %vm1599, %v1683, %v1659
    %v1685 = vsel %vm1598, %v371, %v1682
    %v1686 = vsel %vm1598, 0, %v1684
    %v1687 = vcosq.f32.pop %v1685
    %v1688 = vsinq.f32.pop %v1685
    %vm1689 = vweird.f32 %v371
    %v1690 = vadd.s32 %v1686, 3
    %v1691 = vand.u32 %v1690, 3
    %vm1692 = vcmp.lt.s32.totalorder %v1691, 2
    %vm1693 = vcmp.eq.s32.totalorder %v1691, 0
    %v1694 = vxor.u32 %v1688, 2147483648
    %v1695 = vsel %vm1693, %v1687, %v1694
    %vm1696 = vcmp.eq.s32.totalorder %v1691, 2
    %v1697 = vxor.u32 %v1687, 2147483648
    %v1698 = vsel %vm1696, %v1697, %v1688
    %v1699 = vsel %vm1692, %v1695, %v1698
    %v1700 = vsel %vm1689, nan, %v1699
    %v1701 = vand.u32 2147483647, %v372
    %vm1702 = vcmp.le.f32.partialorder %v1701, 0.7853982
    %vm1703 = vcmp.lt.s32.totalorder %v372, 0
    %v1704 = vand.u32 %v372, 2139095040
    %v1705 = vshrl.u32 %v1704, 23
    %v1706 = vsub.s32 %v1705, 127
    %v1707 = vand.u32 2147483647, %v372
    %v1708 = vand.u32 %v1707, 8388607
    %v1709 = vor.u32 %v1708, 8388608
    %v1710 = vsub.s32 0, %v1709
    %v1711 = vadd.s32 %v1706, 1
    %vm1712 = vcmp.gt.s32.totalorder %v1711, 0
    %v1713 = vsel %vm1712, %v1711, 0
    %v1714 = vshrl.u32 %v1713, 5
    %v1715 = vand.u32 %v1713, 31
    %v1716 = vsub.s32 32, %v1715
    %v1717 = vshrl.u32 683565275, %v1716
    %v1718 = vshll.u32 683565275, %v1715
    %v1719 = vshrl.u32 2475754826, %v1716
    %v1720 = vor.u32 %v1718, %v1719
    %v1721 = vshll.u32 2475754826, %v1715
    %v1722 = vshrl.u32 2131351028, %v1716
    %v1723 = vor.u32 %v1721, %v1722
    %v1724 = vshll.u32 2131351028, %v1715
    %v1725 = vshrl.u32 2102212464, %v1716
    %v1726 = vor.u32 %v1724, %v1725
    %v1727 = vshll.u32 2102212464, %v1715
    %v1728 = vshrl.u32 920167782, %v1716
    %v1729 = vor.u32 %v1727, %v1728
    %v1730 = vshll.u32 920167782, %v1715
    %v1731 = vshrl.u32 1326507024, %v1716
    %v1732 = vor.u32 %v1730, %v1731
    %vm1733 = vcmp.lt.s32.totalorder %v1714, 1
    %vm1734 = vcmp.lt.s32.totalorder %v1714, 2
    %vm1735 = vcmp.lt.s32.totalorder %v1714, 3
    %vm1736 = vcmp.lt.s32.totalorder %v1714, 4
    %v1737 = vsel %vm1733, %v1717, %v1720
    %v1738 = vsel %vm1736, %v1726, 2102212464
    %v1739 = vsel %vm1735, %v1723, %v1738
    %v1740 = vsel %vm1734, %v1737, %v1739
    %v1741 = vsel %vm1733, %v1720, %v1723
    %v1742 = vsel %vm1736, %v1729, 920167782
    %v1743 = vsel %vm1735, %v1726, %v1742
    %v1744 = vsel %vm1734, %v1741, %v1743
    %v1745 = vsel %vm1733, %v1723, %v1726
    %v1746 = vsel %vm1736, %v1732, 1326507024
    %v1747 = vsel %vm1735, %v1729, %v1746
    %v1748 = vsel %vm1734, %v1745, %v1747
    %v1749 = vshll.u32 %v1709, 8
    %v1750 = vmul.u32.u64.compose %v1749, %v1748
    %v1751 = vextract.low.u32 %v1750
    %v1752 = vextract.high.u32 %v1750
    %v1753 = vmul.u32.u64.compose %v1749, %v1744
    %v1754 = vextract.low.u32 %v1753
    %v1755 = vextract.high.u32 %v1753
    %v1756 = vmul.u32 %v1749, %v1740
    %v1757 = vadd.s32 %v1752, %v1754
    %vm1758 = vc.u32 %v1752, %v1754
    %v1759 = vadd.s32 %v1755, 1
    %v1760 = vsel %vm1758, %v1759, %v1755
    %v1761 = vadd.s32 %v1756, %v1760
    %v1762 = vadd.s32 %v1761, 536870912
    %v1763 = vshrl.u32 %v1762, 30
    %v1764 = vshll.u32 %v1763, 30
    %v1765 = vsub.s32 %v1761, %v1764
    %vm1766 = vcmp.lt.s32.totalorder %v1765, 0
    %v1767 = vsub.s32 0, %v1765
    %v1768 = vsel %vm1766, %v1767, %v1765
    %v1769 = vclz %v1768
    %v1770 = vsub.s32 %v1769, 2
    %vm1771 = vcmp.gt.s32.totalorder 0, %v1770
    %v1772 = vsel %vm1771, 0, %v1770
    %v1773 = vsub.s32 32, %v1772
    %v1774 = vshll.u32 %v1765, %v1772
    %v1775 = vshrl.u32 %v1757, %v1773
    %v1776 = vor.u32 %v1774, %v1775
    %v1777 = vsub.s32 4294967266, %v1772
    %v1778 = vadd.s32 %v1777, 127
    %v1779 = vshll.u32 %v1778, 23
    %v1780 = vor.u32 4788187, %v1779
    %v1781 = vand.u32 2147483647, %v1780
    %v1783 = vcvt.s32.f32 %v1776
    %v1784 = vmul.f32 %v1783, %v1781
    %v1785 = vxor.u32 %v1784, 2147483648
    %v1786 = vsel %vm1703, %v1785, %v1784
    %v1787 = vsub.s32 4, %v1763
    %v1788 = vsel %vm1703, %v1787, %v1763
    %v1789 = vsel %vm1702, %v372, %v1786
    %v1790 = vsel %vm1702, 0, %v1788
    %v1791 = vcosq.f32.pop %v1789
    %v1792 = vsinq.f32.pop %v1789
    %vm1793 = vweird.f32 %v372
    %v1794 = vadd.s32 %v1790, 3
    %v1795 = vand.u32 %v1794, 3
    %vm1796 = vcmp.lt.s32.totalorder %v1795, 2
    %vm1797 = vcmp.eq.s32.totalorder %v1795, 0
    %v1798 = vxor.u32 %v1792, 2147483648
    %v1799 = vsel %vm1797, %v1791, %v1798
    %vm1800 = vcmp.eq.s32.totalorder %v1795, 2
    %v1801 = vxor.u32 %v1791, 2147483648
    %v1802 = vsel %vm1800, %v1801, %v1792
    %v1803 = vsel %vm1796, %v1799, %v1802
    %v1804 = vsel %vm1793, nan, %v1803
    %v1805 = vand.u32 2147483647, %v373
    %vm1806 = vcmp.le.f32.partialorder %v1805, 0.7853982
    %vm1807 = vcmp.lt.s32.totalorder %v373, 0
    %v1808 = vand.u32 %v373, 2139095040
    %v1809 = vshrl.u32 %v1808, 23
    %v1810 = vsub.s32 %v1809, 127
    %v1811 = vand.u32 2147483647, %v373
    %v1812 = vand.u32 %v1811, 8388607
    %v1813 = vor.u32 %v1812, 8388608
    %v1814 = vsub.s32 0, %v1813
    %v1815 = vadd.s32 %v1810, 1
    %vm1816 = vcmp.gt.s32.totalorder %v1815, 0
    %v1817 = vsel %vm1816, %v1815, 0
    %v1818 = vshrl.u32 %v1817, 5
    %v1819 = vand.u32 %v1817, 31
    %v1820 = vsub.s32 32, %v1819
    %v1821 = vshrl.u32 683565275, %v1820
    %v1822 = vshll.u32 683565275, %v1819
    %v1823 = vshrl.u32 2475754826, %v1820
    %v1824 = vor.u32 %v1822, %v1823
    %v1825 = vshll.u32 2475754826, %v1819
    %v1826 = vshrl.u32 2131351028, %v1820
    %v1827 = vor.u32 %v1825, %v1826
    %v1828 = vshll.u32 2131351028, %v1819
    %v1829 = vshrl.u32 2102212464, %v1820
    %v1830 = vor.u32 %v1828, %v1829
    %v1831 = vshll.u32 2102212464, %v1819
    %v1832 = vshrl.u32 920167782, %v1820
    %v1833 = vor.u32 %v1831, %v1832
    %v1834 = vshll.u32 920167782, %v1819
    %v1835 = vshrl.u32 1326507024, %v1820
    %v1836 = vor.u32 %v1834, %v1835
    %vm1837 = vcmp.lt.s32.totalorder %v1818, 1
    %vm1838 = vcmp.lt.s32.totalorder %v1818, 2
    %vm1839 = vcmp.lt.s32.totalorder %v1818, 3
    %vm1840 = vcmp.lt.s32.totalorder %v1818, 4
    %v1841 = vsel %vm1837, %v1821, %v1824
    %v1842 = vsel %vm1840, %v1830, 2102212464
    %v1843 = vsel %vm1839, %v1827, %v1842
    %v1844 = vsel %vm1838, %v1841, %v1843
    %v1845 = vsel %vm1837, %v1824, %v1827
    %v1846 = vsel %vm1840, %v1833, 920167782
    %v1847 = vsel %vm1839, %v1830, %v1846
    %v1848 = vsel %vm1838, %v1845, %v1847
    %v1849 = vsel %vm1837, %v1827, %v1830
    %v1850 = vsel %vm1840, %v1836, 1326507024
    %v1851 = vsel %vm1839, %v1833, %v1850
    %v1852 = vsel %vm1838, %v1849, %v1851
    %v1853 = vshll.u32 %v1813, 8
    %v1854 = vmul.u32.u64.compose %v1853, %v1852
    %v1855 = vextract.low.u32 %v1854
    %v1856 = vextract.high.u32 %v1854
    %v1857 = vmul.u32.u64.compose %v1853, %v1848
    %v1858 = vextract.low.u32 %v1857
    %v1859 = vextract.high.u32 %v1857
    %v1860 = vmul.u32 %v1853, %v1844
    %v1861 = vadd.s32 %v1856, %v1858
    %vm1862 = vc.u32 %v1856, %v1858
    %v1863 = vadd.s32 %v1859, 1
    %v1864 = vsel %vm1862, %v1863, %v1859
    %v1865 = vadd.s32 %v1860, %v1864
    %v1866 = vadd.s32 %v1865, 536870912
    %v1867 = vshrl.u32 %v1866, 30
    %v1868 = vshll.u32 %v1867, 30
    %v1869 = vsub.s32 %v1865, %v1868
    %vm1870 = vcmp.lt.s32.totalorder %v1869, 0
    %v1871 = vsub.s32 0, %v1869
    %v1872 = vsel %vm1870, %v1871, %v1869
    %v1873 = vclz %v1872
    %v1874 = vsub.s32 %v1873, 2
    %vm1875 = vcmp.gt.s32.totalorder 0, %v1874
    %v1876 = vsel %vm1875, 0, %v1874
    %v1877 = vsub.s32 32, %v1876
    %v1878 = vshll.u32 %v1869, %v1876
    %v1879 = vshrl.u32 %v1861, %v1877
    %v1880 = vor.u32 %v1878, %v1879
    %v1881 = vsub.s32 4294967266, %v1876
    %v1882 = vadd.s32 %v1881, 127
    %v1883 = vshll.u32 %v1882, 23
    %v1884 = vor.u32 4788187, %v1883
    %v1885 = vand.u32 2147483647, %v1884
    %v1887 = vcvt.s32.f32 %v1880
    %v1888 = vmul.f32 %v1887, %v1885
    %v1889 = vxor.u32 %v1888, 2147483648
    %v1890 = vsel %vm1807, %v1889, %v1888
    %v1891 = vsub.s32 4, %v1867
    %v1892 = vsel %vm1807, %v1891, %v1867
    %v1893 = vsel %vm1806, %v373, %v1890
    %v1894 = vsel %vm1806, 0, %v1892
    %v1895 = vcosq.f32.pop %v1893
    %v1896 = vsinq.f32.pop %v1893
    %vm1897 = vweird.f32 %v373
    %v1898 = vadd.s32 %v1894, 3
    %v1899 = vand.u32 %v1898, 3
    %vm1900 = vcmp.lt.s32.totalorder %v1899, 2
    %vm1901 = vcmp.eq.s32.totalorder %v1899, 0
    %v1902 = vxor.u32 %v1896, 2147483648
    %v1903 = vsel %vm1901, %v1895, %v1902
    %vm1904 = vcmp.eq.s32.totalorder %v1899, 2
    %v1905 = vxor.u32 %v1895, 2147483648
    %v1906 = vsel %vm1904, %v1905, %v1896
    %v1907 = vsel %vm1900, %v1903, %v1906
    %v1908 = vsel %vm1897, nan, %v1907
    %v1909 = vand.u32 2147483647, %v374
    %vm1910 = vcmp.le.f32.partialorder %v1909, 0.7853982
    %vm1911 = vcmp.lt.s32.totalorder %v374, 0
    %v1912 = vand.u32 %v374, 2139095040
    %v1913 = vshrl.u32 %v1912, 23
    %v1914 = vsub.s32 %v1913, 127
    %v1915 = vand.u32 2147483647, %v374
    %v1916 = vand.u32 %v1915, 8388607
    %v1917 = vor.u32 %v1916, 8388608
    %v1918 = vsub.s32 0, %v1917
    %v1919 = vadd.s32 %v1914, 1
    %vm1920 = vcmp.gt.s32.totalorder %v1919, 0
    %v1921 = vsel %vm1920, %v1919, 0
    %v1922 = vshrl.u32 %v1921, 5
    %v1923 = vand.u32 %v1921, 31
    %v1924 = vsub.s32 32, %v1923
    %v1925 = vshrl.u32 683565275, %v1924
    %v1926 = vshll.u32 683565275, %v1923
    %v1927 = vshrl.u32 2475754826, %v1924
    %v1928 = vor.u32 %v1926, %v1927
    %v1929 = vshll.u32 2475754826, %v1923
    %v1930 = vshrl.u32 2131351028, %v1924
    %v1931 = vor.u32 %v1929, %v1930
    %v1932 = vshll.u32 2131351028, %v1923
    %v1933 = vshrl.u32 2102212464, %v1924
    %v1934 = vor.u32 %v1932, %v1933
    %v1935 = vshll.u32 2102212464, %v1923
    %v1936 = vshrl.u32 920167782, %v1924
    %v1937 = vor.u32 %v1935, %v1936
    %v1938 = vshll.u32 920167782, %v1923
    %v1939 = vshrl.u32 1326507024, %v1924
    %v1940 = vor.u32 %v1938, %v1939
    %vm1941 = vcmp.lt.s32.totalorder %v1922, 1
    %vm1942 = vcmp.lt.s32.totalorder %v1922, 2
    %vm1943 = vcmp.lt.s32.totalorder %v1922, 3
    %vm1944 = vcmp.lt.s32.totalorder %v1922, 4
    %v1945 = vsel %vm1941, %v1925, %v1928
    %v1946 = vsel %vm1944, %v1934, 2102212464
    %v1947 = vsel %vm1943, %v1931, %v1946
    %v1948 = vsel %vm1942, %v1945, %v1947
    %v1949 = vsel %vm1941, %v1928, %v1931
    %v1950 = vsel %vm1944, %v1937, 920167782
    %v1951 = vsel %vm1943, %v1934, %v1950
    %v1952 = vsel %vm1942, %v1949, %v1951
    %v1953 = vsel %vm1941, %v1931, %v1934
    %v1954 = vsel %vm1944, %v1940, 1326507024
    %v1955 = vsel %vm1943, %v1937, %v1954
    %v1956 = vsel %vm1942, %v1953, %v1955
    %v1957 = vshll.u32 %v1917, 8
    %v1958 = vmul.u32.u64.compose %v1957, %v1956
    %v1959 = vextract.low.u32 %v1958
    %v1960 = vextract.high.u32 %v1958
    %v1961 = vmul.u32.u64.compose %v1957, %v1952
    %v1962 = vextract.low.u32 %v1961
    %v1963 = vextract.high.u32 %v1961
    %v1964 = vmul.u32 %v1957, %v1948
    %v1965 = vadd.s32 %v1960, %v1962
    %vm1966 = vc.u32 %v1960, %v1962
    %v1967 = vadd.s32 %v1963, 1
    %v1968 = vsel %vm1966, %v1967, %v1963
    %v1969 = vadd.s32 %v1964, %v1968
    %v1970 = vadd.s32 %v1969, 536870912
    %v1971 = vshrl.u32 %v1970, 30
    %v1972 = vshll.u32 %v1971, 30
    %v1973 = vsub.s32 %v1969, %v1972
    %vm1974 = vcmp.lt.s32.totalorder %v1973, 0
    %v1975 = vsub.s32 0, %v1973
    %v1976 = vsel %vm1974, %v1975, %v1973
    %v1977 = vclz %v1976
    %v1978 = vsub.s32 %v1977, 2
    %vm1979 = vcmp.gt.s32.totalorder 0, %v1978
    %v1980 = vsel %vm1979, 0, %v1978
    %v1981 = vsub.s32 32, %v1980
    %v1982 = vshll.u32 %v1973, %v1980
    %v1983 = vshrl.u32 %v1965, %v1981
    %v1984 = vor.u32 %v1982, %v1983
    %v1985 = vsub.s32 4294967266, %v1980
    %v1986 = vadd.s32 %v1985, 127
    %v1987 = vshll.u32 %v1986, 23
    %v1988 = vor.u32 4788187, %v1987
    %v1989 = vand.u32 2147483647, %v1988
    %v1991 = vcvt.s32.f32 %v1984
    %v1992 = vmul.f32 %v1991, %v1989
    %v1993 = vxor.u32 %v1992, 2147483648
    %v1994 = vsel %vm1911, %v1993, %v1992
    %v1995 = vsub.s32 4, %v1971
    %v1996 = vsel %vm1911, %v1995, %v1971
    %v1997 = vsel %vm1910, %v374, %v1994
    %v1998 = vsel %vm1910, 0, %v1996
    %v1999 = vcosq.f32.pop %v1997
    %v2000 = vsinq.f32.pop %v1997
    %vm2001 = vweird.f32 %v374
    %v2002 = vadd.s32 %v1998, 3
    %v2003 = vand.u32 %v2002, 3
    %vm2004 = vcmp.lt.s32.totalorder %v2003, 2
    %vm2005 = vcmp.eq.s32.totalorder %v2003, 0
    %v2006 = vxor.u32 %v2000, 2147483648
    %v2007 = vsel %vm2005, %v1999, %v2006
    %vm2008 = vcmp.eq.s32.totalorder %v2003, 2
    %v2009 = vxor.u32 %v1999, 2147483648
    %v2010 = vsel %vm2008, %v2009, %v2000
    %v2011 = vsel %vm2004, %v2007, %v2010
    %v2012 = vsel %vm2001, nan, %v2011
    %v2013 = vand.u32 2147483647, %v375
    %vm2014 = vcmp.le.f32.partialorder %v2013, 0.7853982
    %vm2015 = vcmp.lt.s32.totalorder %v375, 0
    %v2016 = vand.u32 %v375, 2139095040
    %v2017 = vshrl.u32 %v2016, 23
    %v2018 = vsub.s32 %v2017, 127
    %v2019 = vand.u32 2147483647, %v375
    %v2020 = vand.u32 %v2019, 8388607
    %v2021 = vor.u32 %v2020, 8388608
    %v2022 = vsub.s32 0, %v2021
    %v2023 = vadd.s32 %v2018, 1
    %vm2024 = vcmp.gt.s32.totalorder %v2023, 0
    %v2025 = vsel %vm2024, %v2023, 0
    %v2026 = vshrl.u32 %v2025, 5
    %v2027 = vand.u32 %v2025, 31
    %v2028 = vsub.s32 32, %v2027
    %v2029 = vshrl.u32 683565275, %v2028
    %v2030 = vshll.u32 683565275, %v2027
    %v2031 = vshrl.u32 2475754826, %v2028
    %v2032 = vor.u32 %v2030, %v2031
    %v2033 = vshll.u32 2475754826, %v2027
    %v2034 = vshrl.u32 2131351028, %v2028
    %v2035 = vor.u32 %v2033, %v2034
    %v2036 = vshll.u32 2131351028, %v2027
    %v2037 = vshrl.u32 2102212464, %v2028
    %v2038 = vor.u32 %v2036, %v2037
    %v2039 = vshll.u32 2102212464, %v2027
    %v2040 = vshrl.u32 920167782, %v2028
    %v2041 = vor.u32 %v2039, %v2040
    %v2042 = vshll.u32 920167782, %v2027
    %v2043 = vshrl.u32 1326507024, %v2028
    %v2044 = vor.u32 %v2042, %v2043
    %vm2045 = vcmp.lt.s32.totalorder %v2026, 1
    %vm2046 = vcmp.lt.s32.totalorder %v2026, 2
    %vm2047 = vcmp.lt.s32.totalorder %v2026, 3
    %vm2048 = vcmp.lt.s32.totalorder %v2026, 4
    %v2049 = vsel %vm2045, %v2029, %v2032
    %v2050 = vsel %vm2048, %v2038, 2102212464
    %v2051 = vsel %vm2047, %v2035, %v2050
    %v2052 = vsel %vm2046, %v2049, %v2051
    %v2053 = vsel %vm2045, %v2032, %v2035
    %v2054 = vsel %vm2048, %v2041, 920167782
    %v2055 = vsel %vm2047, %v2038, %v2054
    %v2056 = vsel %vm2046, %v2053, %v2055
    %v2057 = vsel %vm2045, %v2035, %v2038
    %v2058 = vsel %vm2048, %v2044, 1326507024
    %v2059 = vsel %vm2047, %v2041, %v2058
    %v2060 = vsel %vm2046, %v2057, %v2059
    %v2061 = vshll.u32 %v2021, 8
    %v2062 = vmul.u32.u64.compose %v2061, %v2060
    %v2063 = vextract.low.u32 %v2062
    %v2064 = vextract.high.u32 %v2062
    %v2065 = vmul.u32.u64.compose %v2061, %v2056
    %v2066 = vextract.low.u32 %v2065
    %v2067 = vextract.high.u32 %v2065
    %v2068 = vmul.u32 %v2061, %v2052
    %v2069 = vadd.s32 %v2064, %v2066
    %vm2070 = vc.u32 %v2064, %v2066
    %v2071 = vadd.s32 %v2067, 1
    %v2072 = vsel %vm2070, %v2071, %v2067
    %v2073 = vadd.s32 %v2068, %v2072
    %v2074 = vadd.s32 %v2073, 536870912
    %v2075 = vshrl.u32 %v2074, 30
    %v2076 = vshll.u32 %v2075, 30
    %v2077 = vsub.s32 %v2073, %v2076
    %vm2078 = vcmp.lt.s32.totalorder %v2077, 0
    %v2079 = vsub.s32 0, %v2077
    %v2080 = vsel %vm2078, %v2079, %v2077
    %v2081 = vclz %v2080
    %v2082 = vsub.s32 %v2081, 2
    %vm2083 = vcmp.gt.s32.totalorder 0, %v2082
    %v2084 = vsel %vm2083, 0, %v2082
    %v2085 = vsub.s32 32, %v2084
    %v2086 = vshll.u32 %v2077, %v2084
    %v2087 = vshrl.u32 %v2069, %v2085
    %v2088 = vor.u32 %v2086, %v2087
    %v2089 = vsub.s32 4294967266, %v2084
    %v2090 = vadd.s32 %v2089, 127
    %v2091 = vshll.u32 %v2090, 23
    %v2092 = vor.u32 4788187, %v2091
    %v2093 = vand.u32 2147483647, %v2092
    %v2095 = vcvt.s32.f32 %v2088
    %v2096 = vmul.f32 %v2095, %v2093
    %v2097 = vxor.u32 %v2096, 2147483648
    %v2098 = vsel %vm2015, %v2097, %v2096
    %v2099 = vsub.s32 4, %v2075
    %v2100 = vsel %vm2015, %v2099, %v2075
    %v2101 = vsel %vm2014, %v375, %v2098
    %v2102 = vsel %vm2014, 0, %v2100
    %v2103 = vcosq.f32.pop %v2101
    %v2104 = vsinq.f32.pop %v2101
    %vm2105 = vweird.f32 %v375
    %v2106 = vadd.s32 %v2102, 3
    %v2107 = vand.u32 %v2106, 3
    %vm2108 = vcmp.lt.s32.totalorder %v2107, 2
    %vm2109 = vcmp.eq.s32.totalorder %v2107, 0
    %v2110 = vxor.u32 %v2104, 2147483648
    %v2111 = vsel %vm2109, %v2103, %v2110
    %vm2112 = vcmp.eq.s32.totalorder %v2107, 2
    %v2113 = vxor.u32 %v2103, 2147483648
    %v2114 = vsel %vm2112, %v2113, %v2104
    %v2115 = vsel %vm2108, %v2111, %v2114
    %v2116 = vsel %vm2105, nan, %v2115
    %v2117 = vmul.f32 %v318, %v1388
    %v2118 = vmul.f32 %v325, %v1492
    %v2119 = vmul.f32 %v332, %v1596
    %v2120 = vmul.f32 %v339, %v1700
    %v2121 = vmul.f32 %v346, %v1804
    %v2122 = vmul.f32 %v353, %v1908
    %v2123 = vmul.f32 %v360, %v2012
    %v2124 = vmul.f32 %v367, %v2116
    %v2125 = vmul.f32 %v2117, %v1208
    %v2126 = vmul.f32 %v2118, %v1208
    %v2127 = vmul.f32 %v2119, %v1208
    %v2128 = vmul.f32 %v2120, %v1208
    %v2129 = vmul.f32 %v2121, %v1208
    %v2130 = vmul.f32 %v2122, %v1208
    %v2131 = vmul.f32 %v2123, %v1208
    %v2132 = vmul.f32 %v2124, %v1208
    %v2141 = vcombine.low %v2125, %v2126
    %v2142 = vcombine.low %v2127, %v2128
    %v2144 = vunpack.c.l.s4 1983009808
    %v2145 = vunpack.c.0.s8 %v2144
    %v2146 = vlaneseq
    %v2147 = vshrl.u32 %v2146, 7
    %v2148 = vsub.s32 %v2145, %v2147
    %v2149 = vrot.slane %v2141, %v2148
    %v2151 = vunpack.c.l.s4 1983009808
    %v2152 = vunpack.c.0.s8 %v2151
    %v2153 = vlaneseq
    %v2154 = vshrl.u32 %v2153, 7
    %v2155 = vsub.s32 %v2152, %v2154
    %v2156 = vrot.slane %v2142, %v2155
    %v2157 = vcombine.low %v2149, %v2156
    %v2158 = vcombine.low %v2129, %v2130
    %v2159 = vcombine.low %v2131, %v2132
    %v2161 = vunpack.c.l.s4 1983009808
    %v2162 = vunpack.c.0.s8 %v2161
    %v2163 = vlaneseq
    %v2164 = vshrl.u32 %v2163, 7
    %v2165 = vsub.s32 %v2162, %v2164
    %v2166 = vrot.slane %v2158, %v2165
    %v2168 = vunpack.c.l.s4 1983009808
    %v2169 = vunpack.c.0.s8 %v2168
    %v2170 = vlaneseq
    %v2171 = vshrl.u32 %v2170, 7
    %v2172 = vsub.s32 %v2169, %v2171
    %v2173 = vrot.slane %v2159, %v2172
    %v2174 = vcombine.low %v2166, %v2173
    %v2175 = vrot.slane %v2157, 7
    %v2176 = vrot.slane %v2174, 7
    %v2179 = vadd.f32 %v64, %v2175
    %v2180 = vadd.f32 %v65, %v2176
    %v2181 = vadd.f32 %v2179, %v1263
    %v2182 = vadd.f32 %v2180, %v1263
    %v2186 = vunpack.c.l.s4 1966171168
    %v2187 = vunpack.c.0.s8 %v2186
    %v2188 = vlaneseq
    %v2189 = vshrl.u32 %v2188, 7
    %v2190 = vsub.s32 %v2187, %v2189
    %v2191 = vrot.slane %v2181, %v2190
    %v2193 = vunpack.c.l.s4 1966171168
    %v2194 = vunpack.c.0.s8 %v2193
    %v2195 = vlaneseq
    %v2196 = vshrl.u32 %v2195, 7
    %v2197 = vsub.s32 %v2194, %v2196
    %v2198 = vrot.slane %v2182, %v2197
    %v2199 = vcombine.high %v2191, %v2198
    %s2201 = scalar_lea.vmem [#allocation8], 1
    %2202 = vst [vmem:[%s2201] ss:$2 sm:$0xff] %v2199
    // Predicated region
    $region22: #{tpu_custom_call.1} parent=1 // pred_check
      _
    $region23: #{tpu_custom_call.1} parent=1 // pred_check_branch
      %2204 = sbr.rel (0) target = $region25
    $region24: #{tpu_custom_call.1} parent=1 // pred_region
      %s2206 = ssub.s32 256, 256
      %2207 = vsyncadd [#allocation5], %s2206
      %s2209 = sshll.u32 [#allocation8], 4
      %s2210 = int_to_ptr.vmem [resolvable:$true] %s2209
      %2212 = dma.vmem_to_hbm [thread:$0]  %s2210, 256, %s3, [#allocation5]
    $region25: #{tpu_custom_call.1} parent=1 // pred_fallthru
      _
    // Predicated region
    $region26: #{tpu_custom_call.1} parent=1 // pred_check
      _
    $region27: #{tpu_custom_call.1} parent=1 // pred_check_branch
      %2214 = sbr.rel (0) target = $region29
    $region28: #{tpu_custom_call.1} parent=1 // pred_region
      %2215 = dma.done [#allocation5], 256
    $region29: #{tpu_custom_call.1} parent=1 // pred_fallthru
      _
    %2216 = vsyncpa [#allocation4], 1
    %2217 = vsyncpa [#allocation5], 1
    %2218 = vsyncpa [#allocation6], 1

</llo_original>
